<compile_context>
chip_gen: v7x
topology: tpu7x:2x2x1
jax: 0.10.0
libtpu: 0.0.40
codegen_flags: <defaults>
</compile_context>

<pallas_src>
import functools
import math

import jax
import jax.numpy as jnp
from jax.experimental import pallas as pl
from jax.experimental.pallas import tpu as pltpu


# ---------------------------------------------------------------------------
# Fused kernel: all heads + output projection for one batch element.
# ---------------------------------------------------------------------------
def gat_fused_kernel(x_ref, adj_ref, wcat_ref, a1bd_ref, a2rows_ref,
                     mask_ref, wp_ref, bp_ref, o_ref, *, num_heads, alpha):
    x = x_ref[0]               # [N, Fin]
    adj = adj_ref[0]           # [N, N]
    wcat = wcat_ref[...]       # [Fin, H*Fh]
    a1bd = a1bd_ref[...]       # [H*Fh, H]   block-diagonal a1
    a2rows = a2rows_ref[...]   # [H, H*Fh]   per-head a2 rows (block layout)
    head_mask = mask_ref[...]  # [H, H*Fh]   one-hot column selector per head
    wp = wp_ref[...]           # [H*Fh, Fout]
    bp = bp_ref[...]           # [1, Fout]

    # Wh for ALL heads in one lane-dense MXU matmul: [N, H*Fh]
    wh = jnp.dot(x, wcat, preferred_element_type=jnp.float32)

    # f1[n, h] = Wh_h[n] · a1_h     -> [N, H]
    f1 = jnp.dot(wh, a1bd, preferred_element_type=jnp.float32)
    # f2t[h, n] = Wh_h[n] · a2_h    -> [H, N]   (contract last dims, no wh.T)
    f2t = jax.lax.dot_general(a2rows, wh, (((1,), (1,)), ((), ())),
                              preferred_element_type=jnp.float32)

    adj_pos = adj > 0
    neg_big = jnp.float32(-9e15)

    cat = jnp.zeros_like(wh)                               # [N, H*Fh]
    for h in range(num_heads):                             # H is small & static
        # e[i, j] = LeakyReLU(f1[i, h] + f2[j, h])
        e = f1[:, h:h + 1] + f2t[h:h + 1, :]               # [N, N]
        e = jnp.where(e > 0, e, alpha * e)                 # LeakyReLU(alpha)
        e = jnp.where(adj_pos, e, neg_big)                 # adjacency mask

        # softmax over neighbors
        m = jnp.max(e, axis=-1, keepdims=True)
        p = jnp.exp(e - m)
        s = jnp.sum(p, axis=-1, keepdims=True)
        r = pl.reciprocal(s, approx=True)                  # EUP slot
        r = r * (2.0 - s * r)                              # Newton step -> f32 acc.
        attn = p * r                                       # [N, N]

        # h' = attn @ Wh (all columns), ELU, then keep only head-h columns.
        hp = jnp.dot(attn, wh, preferred_element_type=jnp.float32)   # [N, H*Fh]
        hp = jnp.where(hp > 0, hp, jnp.exp(jnp.minimum(hp, 0.0)) - 1.0)  # ELU
        cat = cat + hp * head_mask[h:h + 1, :]

    # Fused output projection: y = cat @ Wp^T + b
    y = jnp.dot(cat, wp, preferred_element_type=jnp.float32) + bp    # [N, Fout]
    o_ref[0] = y


def gat_fused(x, adj, w_cat, a1bd, a2rows, head_mask, wp_t, bp_row,
              *, num_heads, alpha):
    B, N, Fin = x.shape
    HFh = w_cat.shape[1]
    Fout = wp_t.shape[1]
    kernel = functools.partial(gat_fused_kernel, num_heads=num_heads, alpha=alpha)

    flops = B * (2 * N * Fin * HFh                       # x @ W_cat
                 + 2 * N * HFh * num_heads * 2           # f1 and f2
                 + num_heads * (4 * N * N + 2 * N * N * HFh)   # attn + attn@Wh
                 + 2 * N * HFh * Fout)                   # output projection
    cost = pl.CostEstimate(
        flops=flops,
        transcendentals=B * num_heads * N * N,           # exp in softmax
        bytes_accessed=4 * (B * N * Fin + B * N * N + Fin * HFh
                            + HFh * Fout + B * N * Fout),
    )

    return pl.pallas_call(
        kernel,
        out_shape=jax.ShapeDtypeStruct((B, N, Fout), jnp.float32),
        grid_spec=pltpu.PrefetchScalarGridSpec(
            num_scalar_prefetch=0,
            grid=(B,),
            in_specs=[
                pl.BlockSpec((1, N, Fin), lambda b: (b, 0, 0)),
                pl.BlockSpec((1, N, N), lambda b: (b, 0, 0)),
                pl.BlockSpec((Fin, HFh), lambda b: (0, 0)),
                pl.BlockSpec((HFh, num_heads), lambda b: (0, 0)),
                pl.BlockSpec((num_heads, HFh), lambda b: (0, 0)),
                pl.BlockSpec((num_heads, HFh), lambda b: (0, 0)),
                pl.BlockSpec((HFh, Fout), lambda b: (0, 0)),
                pl.BlockSpec((1, Fout), lambda b: (0, 0)),
            ],
            out_specs=pl.BlockSpec((1, N, Fout), lambda b: (b, 0, 0)),
        ),
        compiler_params=pltpu.CompilerParams(
            dimension_semantics=("parallel",)),   # B independent -> megacore
        cost_estimate=cost,
    )(x, adj, w_cat, a1bd, a2rows, head_mask, wp_t, bp_row)


# ---------------------------------------------------------------------------
# Full module forward (builds the fused parameter tensors from base params)
# ---------------------------------------------------------------------------
def multi_head_gat_forward(x, adj, params, *, alpha=0.2):
    W, a1, a2 = params["W"], params["a1"], params["a2"]   # [H,Fin,Fh], [H,Fh]x2
    H, Fin, Fh = W.shape
    HFh = H * Fh

    # Head-major concat layout (matches torch.cat(head_outputs, dim=-1)).
    w_cat = jnp.transpose(W, (1, 0, 2)).reshape(Fin, HFh)        # [Fin, H*Fh]
    eye = jnp.eye(H, dtype=W.dtype)
    a1bd = (a1[:, :, None] * eye[:, None, :]).reshape(HFh, H)    # [H*Fh, H]
    a2rows = (a2[:, None, :] * eye[:, :, None]).reshape(H, HFh)  # [H, H*Fh]
    head_mask = jnp.repeat(eye, Fh, axis=1)                      # [H, H*Fh]

    wp_t = params["Wp_t"]                                        # [H*Fh, Fout]
    Fout = wp_t.shape[1]
    bp_row = params["bp"].reshape(1, Fout)

    return gat_fused(x, adj, w_cat, a1bd, a2rows, head_mask, wp_t, bp_row,
                     num_heads=H, alpha=alpha)


# ---------------------------------------------------------------------------
# Pure-JAX reference (for verification)
# ---------------------------------------------------------------------------
def ref_forward(x, adj, params, *, alpha=0.2):
    W, a1, a2 = params["W"], params["a1"], params["a2"]
    H = W.shape[0]
    heads = []
    for h in range(H):
        wh = jnp.einsum("bnf,fg->bng", x, W[h])                  # [B,N,Fh]
        f1 = jnp.sum(wh * a1[h], axis=-1, keepdims=True)         # [B,N,1]
        f2 = jnp.sum(wh * a2[h], axis=-1)[:, None, :]            # [B,1,N]
        e = f1 + f2
        e = jnp.where(e > 0, e, alpha * e)
        e = jnp.where(adj > 0, e, -9e15)
        attn = jax.nn.softmax(e, axis=-1)
        hp = jnp.einsum("bnm,bmg->bng", attn, wh)
        heads.append(jnp.where(hp > 0, hp, jnp.exp(hp) - 1.0))
    cat = jnp.concatenate(heads, axis=-1)
    return jnp.einsum("bnf,fg->bng", cat, params["Wp_t"]) + params["bp"]


# ---------------------------------------------------------------------------
# Deterministic parameter init (xavier_uniform with gain 1.414, like PyTorch)
# ---------------------------------------------------------------------------
def xavier_uniform(key, shape, fan_in, fan_out, gain=1.414):
    bound = gain * math.sqrt(6.0 / (fan_in + fan_out))
    return jax.random.uniform(key, shape, jnp.float32, -bound, bound)


def init_params(key, in_features, out_features, num_heads):
    fh = out_features // num_heads
    keys = jax.random.split(key, 4)
    W = xavier_uniform(keys[0], (num_heads, in_features, fh), in_features, fh)
    a = xavier_uniform(keys[1], (num_heads, 2 * fh, 1), 2 * fh, 1)
    a1 = a[:, :fh, 0]                      # [H, Fh]
    a2 = a[:, fh:, 0]                      # [H, Fh]
    # nn.Linear(out_features, out_features): y = x @ Wp^T + bp
    Wp = xavier_uniform(keys[2], (out_features, out_features),
                        out_features, out_features, gain=1.0)
    bp = jax.random.uniform(keys[3], (out_features,), jnp.float32, -0.1, 0.1)
    return {"W": W, "a1": a1, "a2": a2, "Wp_t": Wp.T, "bp": bp}


if __name__ == "__main__":
    B, N = 2, 16
    in_features, out_features, num_heads = 16, 32, 4

    key = jax.random.PRNGKey(0)
    kx, kadj, kp = jax.random.split(key, 3)

    x = jax.random.normal(kx, (B, N, in_features), jnp.float32)
    # random adjacency with self loops
    adj = (jax.random.uniform(kadj, (B, N, N)) > 0.5).astype(jnp.float32)
    adj = adj + jnp.eye(N, dtype=jnp.float32)[None]
    adj = (adj > 0).astype(jnp.float32)

    params = init_params(kp, in_features, out_features, num_heads)

    out = multi_head_gat_forward(x, adj, params, alpha=0.2)
    out = jax.block_until_ready(out)

    ref = ref_forward(x, adj, params, alpha=0.2)
    assert out.shape == (B, N, out_features)
    err = jnp.max(jnp.abs(out - ref))
    assert jnp.allclose(out, ref, atol=1e-3, rtol=1e-3), f"mismatch vs reference: {err}"

    print("KERNEL_OK")
</pallas_src>

<mosaic_0001>
module attributes {stable_mosaic.version = 11 : i64} {
  func.func @gat_fused_kernel(%arg0: i32, %arg1: memref<1x16x16xf32, #tpu.memory_space<vmem>>, %arg2: memref<1x16x16xf32, #tpu.memory_space<vmem>>, %arg3: memref<16x32xf32, #tpu.memory_space<vmem>>, %arg4: memref<32x4xf32, #tpu.memory_space<vmem>>, %arg5: memref<4x32xf32, #tpu.memory_space<vmem>>, %arg6: memref<4x32xf32, #tpu.memory_space<vmem>>, %arg7: memref<32x32xf32, #tpu.memory_space<vmem>>, %arg8: memref<1x32xf32, #tpu.memory_space<vmem>>, %arg9: memref<1x16x32xf32, #tpu.memory_space<vmem>>) attributes {dimension_semantics = [#tpu.dimension_semantics<parallel>], iteration_bounds = array<i64: 2>, scalar_prefetch = 0 : i64, scratch_operands = 0 : i64, tpu.core_type = #tpu.core_type<tc>, window_params = [{transform_indices = @transform_0, window_bounds = array<i64: 1, 16, 16>}, {transform_indices = @transform_1, window_bounds = array<i64: 1, 16, 16>}, {pipeline_mode = #tpu.pipeline_mode<synchronous>, transform_indices = @transform_2, window_bounds = array<i64: 16, 32>}, {pipeline_mode = #tpu.pipeline_mode<synchronous>, transform_indices = @transform_3, window_bounds = array<i64: 32, 4>}, {pipeline_mode = #tpu.pipeline_mode<synchronous>, transform_indices = @transform_4, window_bounds = array<i64: 4, 32>}, {pipeline_mode = #tpu.pipeline_mode<synchronous>, transform_indices = @transform_5, window_bounds = array<i64: 4, 32>}, {pipeline_mode = #tpu.pipeline_mode<synchronous>, transform_indices = @transform_6, window_bounds = array<i64: 32, 32>}, {pipeline_mode = #tpu.pipeline_mode<synchronous>, transform_indices = @transform_7, window_bounds = array<i64: 1, 32>}, {transform_indices = @transform_8, window_bounds = array<i64: 1, 16, 32>}]} {
    %c0 = arith.constant 0 : index
    %c0_0 = arith.constant 0 : index
    %c0_1 = arith.constant 0 : index
    %0 = vector.load %arg1[%c0, %c0_0, %c0_1] : memref<1x16x16xf32, #tpu.memory_space<vmem>>, vector<1x16x16xf32>
    %1 = vector.shape_cast %0 : vector<1x16x16xf32> to vector<16x16xf32>
    %c0_2 = arith.constant 0 : index
    %c0_3 = arith.constant 0 : index
    %c0_4 = arith.constant 0 : index
    %2 = vector.load %arg2[%c0_2, %c0_3, %c0_4] : memref<1x16x16xf32, #tpu.memory_space<vmem>>, vector<1x16x16xf32>
    %3 = vector.shape_cast %2 : vector<1x16x16xf32> to vector<16x16xf32>
    %c0_5 = arith.constant 0 : index
    %c0_6 = arith.constant 0 : index
    %4 = vector.load %arg3[%c0_5, %c0_6] : memref<16x32xf32, #tpu.memory_space<vmem>>, vector<16x32xf32>
    %c0_7 = arith.constant 0 : index
    %c0_8 = arith.constant 0 : index
    %5 = vector.load %arg4[%c0_7, %c0_8] : memref<32x4xf32, #tpu.memory_space<vmem>>, vector<32x4xf32>
    %c0_9 = arith.constant 0 : index
    %c0_10 = arith.constant 0 : index
    %6 = vector.load %arg5[%c0_9, %c0_10] : memref<4x32xf32, #tpu.memory_space<vmem>>, vector<4x32xf32>
    %c0_11 = arith.constant 0 : index
    %c0_12 = arith.constant 0 : index
    %7 = vector.load %arg6[%c0_11, %c0_12] : memref<4x32xf32, #tpu.memory_space<vmem>>, vector<4x32xf32>
    %c0_13 = arith.constant 0 : index
    %c0_14 = arith.constant 0 : index
    %8 = vector.load %arg7[%c0_13, %c0_14] : memref<32x32xf32, #tpu.memory_space<vmem>>, vector<32x32xf32>
    %c0_15 = arith.constant 0 : index
    %c0_16 = arith.constant 0 : index
    %9 = vector.load %arg8[%c0_15, %c0_16] : memref<1x32xf32, #tpu.memory_space<vmem>>, vector<1x32xf32>
    %cst = arith.constant dense<0.000000e+00> : vector<16x32xf32>
    %10 = tpu.matmul %1, %4, %cst {dimension_numbers = #tpu.dot_dimension_numbers<[1], [0], [0], [1], [0, 0, 1, 1], [], []>} : vector<16x16xf32>, vector<16x32xf32>, vector<16x32xf32> -> vector<16x32xf32>
    %cst_17 = arith.constant dense<0.000000e+00> : vector<16x4xf32>
    %11 = tpu.matmul %10, %5, %cst_17 {dimension_numbers = #tpu.dot_dimension_numbers<[1], [0], [0], [1], [0, 0, 1, 1], [], []>} : vector<16x32xf32>, vector<32x4xf32>, vector<16x4xf32> -> vector<16x4xf32>
    %cst_18 = arith.constant dense<0.000000e+00> : vector<4x16xf32>
    %12 = tpu.matmul %6, %10, %cst_18 {dimension_numbers = #tpu.dot_dimension_numbers<[1], [1], [0], [0], [0, 0, 1, 0], [], []>} : vector<4x32xf32>, vector<16x32xf32>, vector<4x16xf32> -> vector<4x16xf32>
    %cst_19 = arith.constant 0.000000e+00 : f32
    %13 = vector.broadcast %cst_19 : f32 to vector<16x16xf32>
    %14 = arith.cmpf ogt, %3, %13 : vector<16x16xf32>
    %cst_20 = arith.constant 0.000000e+00 : f32
    %15 = vector.broadcast %cst_20 : f32 to vector<16x32xf32>
    %16 = vector.extract_strided_slice %11 {offsets = [0, 0], sizes = [16, 1], strides = [1, 1]} : vector<16x4xf32> to vector<16x1xf32>
    %17 = vector.extract_strided_slice %12 {offsets = [0, 0], sizes = [1, 16], strides = [1, 1]} : vector<4x16xf32> to vector<1x16xf32>
    %18 = vector.broadcast %16 : vector<16x1xf32> to vector<16x16xf32>
    %19 = vector.broadcast %17 : vector<1x16xf32> to vector<16x16xf32>
    %20 = arith.addf %18, %19 : vector<16x16xf32>
    %cst_21 = arith.constant 0.000000e+00 : f32
    %21 = vector.broadcast %cst_21 : f32 to vector<16x16xf32>
    %22 = arith.cmpf ogt, %20, %21 : vector<16x16xf32>
    %cst_22 = arith.constant 2.000000e-01 : f32
    %23 = vector.broadcast %cst_22 : f32 to vector<16x16xf32>
    %24 = arith.mulf %23, %20 : vector<16x16xf32>
    %25 = arith.select %22, %20, %24 : vector<16x16xi1>, vector<16x16xf32>
    %cst_23 = arith.constant -9.000000e+15 : f32
    %26 = vector.broadcast %cst_23 : f32 to vector<16x16xf32>
    %27 = arith.select %14, %25, %26 : vector<16x16xi1>, vector<16x16xf32>
    %cst_24 = arith.constant dense<0xFF800000> : vector<16xf32>
    %28 = vector.multi_reduction <maximumf>, %27, %cst_24 [1] : vector<16x16xf32> to vector<16xf32>
    %29 = vector.shape_cast %28 : vector<16xf32> to vector<16x1xf32>
    %30 = vector.broadcast %29 : vector<16x1xf32> to vector<16x16xf32>
    %31 = arith.subf %27, %30 : vector<16x16xf32>
    %32 = math.exp %31 : vector<16x16xf32>
    %cst_25 = arith.constant dense<0.000000e+00> : vector<16xf32>
    %33 = vector.multi_reduction <add>, %32, %cst_25 [1] : vector<16x16xf32> to vector<16xf32>
    %34 = vector.shape_cast %33 : vector<16xf32> to vector<16x1xf32>
    %35 = tpu.reciprocal %34 {approx = true} : vector<16x1xf32> -> vector<16x1xf32>
    %36 = arith.mulf %34, %35 : vector<16x1xf32>
    %cst_26 = arith.constant 2.000000e+00 : f32
    %37 = vector.broadcast %cst_26 : f32 to vector<16x1xf32>
    %38 = arith.subf %37, %36 : vector<16x1xf32>
    %39 = arith.mulf %35, %38 : vector<16x1xf32>
    %40 = vector.broadcast %39 : vector<16x1xf32> to vector<16x16xf32>
    %41 = arith.mulf %32, %40 : vector<16x16xf32>
    %cst_27 = arith.constant dense<0.000000e+00> : vector<16x32xf32>
    %42 = tpu.matmul %41, %10, %cst_27 {dimension_numbers = #tpu.dot_dimension_numbers<[1], [0], [0], [1], [0, 0, 1, 1], [], []>} : vector<16x16xf32>, vector<16x32xf32>, vector<16x32xf32> -> vector<16x32xf32>
    %cst_28 = arith.constant 0.000000e+00 : f32
    %43 = vector.broadcast %cst_28 : f32 to vector<16x32xf32>
    %44 = arith.cmpf ogt, %42, %43 : vector<16x32xf32>
    %cst_29 = arith.constant 0.000000e+00 : f32
    %45 = vector.broadcast %cst_29 : f32 to vector<16x32xf32>
    %46 = arith.minimumf %42, %45 : vector<16x32xf32>
    %47 = math.exp %46 : vector<16x32xf32>
    %cst_30 = arith.constant 1.000000e+00 : f32
    %48 = vector.broadcast %cst_30 : f32 to vector<16x32xf32>
    %49 = arith.subf %47, %48 : vector<16x32xf32>
    %50 = arith.select %44, %42, %49 : vector<16x32xi1>, vector<16x32xf32>
    %51 = vector.extract_strided_slice %7 {offsets = [0, 0], sizes = [1, 32], strides = [1, 1]} : vector<4x32xf32> to vector<1x32xf32>
    %52 = vector.broadcast %51 : vector<1x32xf32> to vector<16x32xf32>
    %53 = arith.mulf %50, %52 : vector<16x32xf32>
    %54 = arith.addf %15, %53 : vector<16x32xf32>
    %55 = vector.extract_strided_slice %11 {offsets = [0, 1], sizes = [16, 1], strides = [1, 1]} : vector<16x4xf32> to vector<16x1xf32>
    %56 = vector.extract_strided_slice %12 {offsets = [1, 0], sizes = [1, 16], strides = [1, 1]} : vector<4x16xf32> to vector<1x16xf32>
    %57 = vector.broadcast %55 : vector<16x1xf32> to vector<16x16xf32>
    %58 = vector.broadcast %56 : vector<1x16xf32> to vector<16x16xf32>
    %59 = arith.addf %57, %58 : vector<16x16xf32>
    %cst_31 = arith.constant 0.000000e+00 : f32
    %60 = vector.broadcast %cst_31 : f32 to vector<16x16xf32>
    %61 = arith.cmpf ogt, %59, %60 : vector<16x16xf32>
    %cst_32 = arith.constant 2.000000e-01 : f32
    %62 = vector.broadcast %cst_32 : f32 to vector<16x16xf32>
    %63 = arith.mulf %62, %59 : vector<16x16xf32>
    %64 = arith.select %61, %59, %63 : vector<16x16xi1>, vector<16x16xf32>
    %cst_33 = arith.constant -9.000000e+15 : f32
    %65 = vector.broadcast %cst_33 : f32 to vector<16x16xf32>
    %66 = arith.select %14, %64, %65 : vector<16x16xi1>, vector<16x16xf32>
    %cst_34 = arith.constant dense<0xFF800000> : vector<16xf32>
    %67 = vector.multi_reduction <maximumf>, %66, %cst_34 [1] : vector<16x16xf32> to vector<16xf32>
    %68 = vector.shape_cast %67 : vector<16xf32> to vector<16x1xf32>
    %69 = vector.broadcast %68 : vector<16x1xf32> to vector<16x16xf32>
    %70 = arith.subf %66, %69 : vector<16x16xf32>
    %71 = math.exp %70 : vector<16x16xf32>
    %cst_35 = arith.constant dense<0.000000e+00> : vector<16xf32>
    %72 = vector.multi_reduction <add>, %71, %cst_35 [1] : vector<16x16xf32> to vector<16xf32>
    %73 = vector.shape_cast %72 : vector<16xf32> to vector<16x1xf32>
    %74 = tpu.reciprocal %73 {approx = true} : vector<16x1xf32> -> vector<16x1xf32>
    %75 = arith.mulf %73, %74 : vector<16x1xf32>
    %cst_36 = arith.constant 2.000000e+00 : f32
    %76 = vector.broadcast %cst_36 : f32 to vector<16x1xf32>
    %77 = arith.subf %76, %75 : vector<16x1xf32>
    %78 = arith.mulf %74, %77 : vector<16x1xf32>
    %79 = vector.broadcast %78 : vector<16x1xf32> to vector<16x16xf32>
    %80 = arith.mulf %71, %79 : vector<16x16xf32>
    %cst_37 = arith.constant dense<0.000000e+00> : vector<16x32xf32>
    %81 = tpu.matmul %80, %10, %cst_37 {dimension_numbers = #tpu.dot_dimension_numbers<[1], [0], [0], [1], [0, 0, 1, 1], [], []>} : vector<16x16xf32>, vector<16x32xf32>, vector<16x32xf32> -> vector<16x32xf32>
    %cst_38 = arith.constant 0.000000e+00 : f32
    %82 = vector.broadcast %cst_38 : f32 to vector<16x32xf32>
    %83 = arith.cmpf ogt, %81, %82 : vector<16x32xf32>
    %cst_39 = arith.constant 0.000000e+00 : f32
    %84 = vector.broadcast %cst_39 : f32 to vector<16x32xf32>
    %85 = arith.minimumf %81, %84 : vector<16x32xf32>
    %86 = math.exp %85 : vector<16x32xf32>
    %cst_40 = arith.constant 1.000000e+00 : f32
    %87 = vector.broadcast %cst_40 : f32 to vector<16x32xf32>
    %88 = arith.subf %86, %87 : vector<16x32xf32>
    %89 = arith.select %83, %81, %88 : vector<16x32xi1>, vector<16x32xf32>
    %90 = vector.extract_strided_slice %7 {offsets = [1, 0], sizes = [1, 32], strides = [1, 1]} : vector<4x32xf32> to vector<1x32xf32>
    %91 = vector.broadcast %90 : vector<1x32xf32> to vector<16x32xf32>
    %92 = arith.mulf %89, %91 : vector<16x32xf32>
    %93 = arith.addf %54, %92 : vector<16x32xf32>
    %94 = vector.extract_strided_slice %11 {offsets = [0, 2], sizes = [16, 1], strides = [1, 1]} : vector<16x4xf32> to vector<16x1xf32>
    %95 = vector.extract_strided_slice %12 {offsets = [2, 0], sizes = [1, 16], strides = [1, 1]} : vector<4x16xf32> to vector<1x16xf32>
    %96 = vector.broadcast %94 : vector<16x1xf32> to vector<16x16xf32>
    %97 = vector.broadcast %95 : vector<1x16xf32> to vector<16x16xf32>
    %98 = arith.addf %96, %97 : vector<16x16xf32>
    %cst_41 = arith.constant 0.000000e+00 : f32
    %99 = vector.broadcast %cst_41 : f32 to vector<16x16xf32>
    %100 = arith.cmpf ogt, %98, %99 : vector<16x16xf32>
    %cst_42 = arith.constant 2.000000e-01 : f32
    %101 = vector.broadcast %cst_42 : f32 to vector<16x16xf32>
    %102 = arith.mulf %101, %98 : vector<16x16xf32>
    %103 = arith.select %100, %98, %102 : vector<16x16xi1>, vector<16x16xf32>
    %cst_43 = arith.constant -9.000000e+15 : f32
    %104 = vector.broadcast %cst_43 : f32 to vector<16x16xf32>
    %105 = arith.select %14, %103, %104 : vector<16x16xi1>, vector<16x16xf32>
    %cst_44 = arith.constant dense<0xFF800000> : vector<16xf32>
    %106 = vector.multi_reduction <maximumf>, %105, %cst_44 [1] : vector<16x16xf32> to vector<16xf32>
    %107 = vector.shape_cast %106 : vector<16xf32> to vector<16x1xf32>
    %108 = vector.broadcast %107 : vector<16x1xf32> to vector<16x16xf32>
    %109 = arith.subf %105, %108 : vector<16x16xf32>
    %110 = math.exp %109 : vector<16x16xf32>
    %cst_45 = arith.constant dense<0.000000e+00> : vector<16xf32>
    %111 = vector.multi_reduction <add>, %110, %cst_45 [1] : vector<16x16xf32> to vector<16xf32>
    %112 = vector.shape_cast %111 : vector<16xf32> to vector<16x1xf32>
    %113 = tpu.reciprocal %112 {approx = true} : vector<16x1xf32> -> vector<16x1xf32>
    %114 = arith.mulf %112, %113 : vector<16x1xf32>
    %cst_46 = arith.constant 2.000000e+00 : f32
    %115 = vector.broadcast %cst_46 : f32 to vector<16x1xf32>
    %116 = arith.subf %115, %114 : vector<16x1xf32>
    %117 = arith.mulf %113, %116 : vector<16x1xf32>
    %118 = vector.broadcast %117 : vector<16x1xf32> to vector<16x16xf32>
    %119 = arith.mulf %110, %118 : vector<16x16xf32>
    %cst_47 = arith.constant dense<0.000000e+00> : vector<16x32xf32>
    %120 = tpu.matmul %119, %10, %cst_47 {dimension_numbers = #tpu.dot_dimension_numbers<[1], [0], [0], [1], [0, 0, 1, 1], [], []>} : vector<16x16xf32>, vector<16x32xf32>, vector<16x32xf32> -> vector<16x32xf32>
    %cst_48 = arith.constant 0.000000e+00 : f32
    %121 = vector.broadcast %cst_48 : f32 to vector<16x32xf32>
    %122 = arith.cmpf ogt, %120, %121 : vector<16x32xf32>
    %cst_49 = arith.constant 0.000000e+00 : f32
    %123 = vector.broadcast %cst_49 : f32 to vector<16x32xf32>
    %124 = arith.minimumf %120, %123 : vector<16x32xf32>
    %125 = math.exp %124 : vector<16x32xf32>
    %cst_50 = arith.constant 1.000000e+00 : f32
    %126 = vector.broadcast %cst_50 : f32 to vector<16x32xf32>
    %127 = arith.subf %125, %126 : vector<16x32xf32>
    %128 = arith.select %122, %120, %127 : vector<16x32xi1>, vector<16x32xf32>
    %129 = vector.extract_strided_slice %7 {offsets = [2, 0], sizes = [1, 32], strides = [1, 1]} : vector<4x32xf32> to vector<1x32xf32>
    %130 = vector.broadcast %129 : vector<1x32xf32> to vector<16x32xf32>
    %131 = arith.mulf %128, %130 : vector<16x32xf32>
    %132 = arith.addf %93, %131 : vector<16x32xf32>
    %133 = vector.extract_strided_slice %11 {offsets = [0, 3], sizes = [16, 1], strides = [1, 1]} : vector<16x4xf32> to vector<16x1xf32>
    %134 = vector.extract_strided_slice %12 {offsets = [3, 0], sizes = [1, 16], strides = [1, 1]} : vector<4x16xf32> to vector<1x16xf32>
    %135 = vector.broadcast %133 : vector<16x1xf32> to vector<16x16xf32>
    %136 = vector.broadcast %134 : vector<1x16xf32> to vector<16x16xf32>
    %137 = arith.addf %135, %136 : vector<16x16xf32>
    %cst_51 = arith.constant 0.000000e+00 : f32
    %138 = vector.broadcast %cst_51 : f32 to vector<16x16xf32>
    %139 = arith.cmpf ogt, %137, %138 : vector<16x16xf32>
    %cst_52 = arith.constant 2.000000e-01 : f32
    %140 = vector.broadcast %cst_52 : f32 to vector<16x16xf32>
    %141 = arith.mulf %140, %137 : vector<16x16xf32>
    %142 = arith.select %139, %137, %141 : vector<16x16xi1>, vector<16x16xf32>
    %cst_53 = arith.constant -9.000000e+15 : f32
    %143 = vector.broadcast %cst_53 : f32 to vector<16x16xf32>
    %144 = arith.select %14, %142, %143 : vector<16x16xi1>, vector<16x16xf32>
    %cst_54 = arith.constant dense<0xFF800000> : vector<16xf32>
    %145 = vector.multi_reduction <maximumf>, %144, %cst_54 [1] : vector<16x16xf32> to vector<16xf32>
    %146 = vector.shape_cast %145 : vector<16xf32> to vector<16x1xf32>
    %147 = vector.broadcast %146 : vector<16x1xf32> to vector<16x16xf32>
    %148 = arith.subf %144, %147 : vector<16x16xf32>
    %149 = math.exp %148 : vector<16x16xf32>
    %cst_55 = arith.constant dense<0.000000e+00> : vector<16xf32>
    %150 = vector.multi_reduction <add>, %149, %cst_55 [1] : vector<16x16xf32> to vector<16xf32>
    %151 = vector.shape_cast %150 : vector<16xf32> to vector<16x1xf32>
    %152 = tpu.reciprocal %151 {approx = true} : vector<16x1xf32> -> vector<16x1xf32>
    %153 = arith.mulf %151, %152 : vector<16x1xf32>
    %cst_56 = arith.constant 2.000000e+00 : f32
    %154 = vector.broadcast %cst_56 : f32 to vector<16x1xf32>
    %155 = arith.subf %154, %153 : vector<16x1xf32>
    %156 = arith.mulf %152, %155 : vector<16x1xf32>
    %157 = vector.broadcast %156 : vector<16x1xf32> to vector<16x16xf32>
    %158 = arith.mulf %149, %157 : vector<16x16xf32>
    %cst_57 = arith.constant dense<0.000000e+00> : vector<16x32xf32>
    %159 = tpu.matmul %158, %10, %cst_57 {dimension_numbers = #tpu.dot_dimension_numbers<[1], [0], [0], [1], [0, 0, 1, 1], [], []>} : vector<16x16xf32>, vector<16x32xf32>, vector<16x32xf32> -> vector<16x32xf32>
    %cst_58 = arith.constant 0.000000e+00 : f32
    %160 = vector.broadcast %cst_58 : f32 to vector<16x32xf32>
    %161 = arith.cmpf ogt, %159, %160 : vector<16x32xf32>
    %cst_59 = arith.constant 0.000000e+00 : f32
    %162 = vector.broadcast %cst_59 : f32 to vector<16x32xf32>
    %163 = arith.minimumf %159, %162 : vector<16x32xf32>
    %164 = math.exp %163 : vector<16x32xf32>
    %cst_60 = arith.constant 1.000000e+00 : f32
    %165 = vector.broadcast %cst_60 : f32 to vector<16x32xf32>
    %166 = arith.subf %164, %165 : vector<16x32xf32>
    %167 = arith.select %161, %159, %166 : vector<16x32xi1>, vector<16x32xf32>
    %168 = vector.extract_strided_slice %7 {offsets = [3, 0], sizes = [1, 32], strides = [1, 1]} : vector<4x32xf32> to vector<1x32xf32>
    %169 = vector.broadcast %168 : vector<1x32xf32> to vector<16x32xf32>
    %170 = arith.mulf %167, %169 : vector<16x32xf32>
    %171 = arith.addf %132, %170 : vector<16x32xf32>
    %cst_61 = arith.constant dense<0.000000e+00> : vector<16x32xf32>
    %172 = tpu.matmul %171, %8, %cst_61 {dimension_numbers = #tpu.dot_dimension_numbers<[1], [0], [0], [1], [0, 0, 1, 1], [], []>} : vector<16x32xf32>, vector<32x32xf32>, vector<16x32xf32> -> vector<16x32xf32>
    %173 = vector.broadcast %9 : vector<1x32xf32> to vector<16x32xf32>
    %174 = arith.addf %172, %173 : vector<16x32xf32>
    %c0_62 = arith.constant 0 : index
    %c0_63 = arith.constant 0 : index
    %c0_64 = arith.constant 0 : index
    %175 = vector.load %arg9[%c0_62, %c0_63, %c0_64] : memref<1x16x32xf32, #tpu.memory_space<vmem>>, vector<1x16x32xf32>
    %176 = vector.shape_cast %175 : vector<1x16x32xf32> to vector<16x32xf32>
    %177 = vector.shape_cast %174 : vector<16x32xf32> to vector<1x16x32xf32>
    tpu.vector_store %arg9[%c0_62, %c0_63, %c0_64], %177 {strides = array<i32>} : memref<1x16x32xf32, #tpu.memory_space<vmem>>, vector<1x16x32xf32>,
    return
  }
  func.func @transform_0(%arg0: i32) -> (i32, i32, i32) {
    %c0_i32 = arith.constant 0 : i32
    %c0_i32_0 = arith.constant 0 : i32
    %c0_i32_1 = arith.constant 0 : i32
    return %arg0, %c0_i32, %c0_i32_0 : i32, i32, i32
  }
  func.func @transform_1(%arg0: i32) -> (i32, i32, i32) {
    %c0_i32 = arith.constant 0 : i32
    %c0_i32_0 = arith.constant 0 : i32
    %c0_i32_1 = arith.constant 0 : i32
    return %arg0, %c0_i32, %c0_i32_0 : i32, i32, i32
  }
  func.func @transform_2(%arg0: i32) -> (i32, i32) {
    %c0_i32 = arith.constant 0 : i32
    %c0_i32_0 = arith.constant 0 : i32
    %c0_i32_1 = arith.constant 0 : i32
    return %c0_i32, %c0_i32_0 : i32, i32
  }
  func.func @transform_3(%arg0: i32) -> (i32, i32) {
    %c0_i32 = arith.constant 0 : i32
    %c0_i32_0 = arith.constant 0 : i32
    %c0_i32_1 = arith.constant 0 : i32
    return %c0_i32, %c0_i32_0 : i32, i32
  }
  func.func @transform_4(%arg0: i32) -> (i32, i32) {
    %c0_i32 = arith.constant 0 : i32
    %c0_i32_0 = arith.constant 0 : i32
    %c0_i32_1 = arith.constant 0 : i32
    return %c0_i32, %c0_i32_0 : i32, i32
  }
  func.func @transform_5(%arg0: i32) -> (i32, i32) {
    %c0_i32 = arith.constant 0 : i32
    %c0_i32_0 = arith.constant 0 : i32
    %c0_i32_1 = arith.constant 0 : i32
    return %c0_i32, %c0_i32_0 : i32, i32
  }
  func.func @transform_6(%arg0: i32) -> (i32, i32) {
    %c0_i32 = arith.constant 0 : i32
    %c0_i32_0 = arith.constant 0 : i32
    %c0_i32_1 = arith.constant 0 : i32
    return %c0_i32, %c0_i32_0 : i32, i32
  }
  func.func @transform_7(%arg0: i32) -> (i32, i32) {
    %c0_i32 = arith.constant 0 : i32
    %c0_i32_0 = arith.constant 0 : i32
    %c0_i32_1 = arith.constant 0 : i32
    return %c0_i32, %c0_i32_0 : i32, i32
  }
  func.func @transform_8(%arg0: i32) -> (i32, i32, i32) {
    %c0_i32 = arith.constant 0 : i32
    %c0_i32_0 = arith.constant 0 : i32
    %c0_i32_1 = arith.constant 0 : i32
    return %arg0, %c0_i32, %c0_i32_0 : i32, i32, i32
  }
}

</mosaic_0001>

<llo_original>
// kernel: tpu_custom_call.1
$region0: #{tpu_custom_call.1}
  #allocation0 [shape = 'u32[]', space=smem, size = 0x4, offset = 0x4, fixed_abs, tag = 'smem constant byte address 0x4 - core index']
  #allocation1 [shape = 'u32[144,128]{1,0:T(1,128)}', space=vmem, size = 0x12000, scoped, tag = 'internal scratch']
  %s0 = inlined_call_operand.vmem [shape: f32[2,16,16], index: 0, kind: input, shape index: {}]
  %s1 = inlined_call_operand.hbm [shape: f32[2,16,16], index: 1, kind: input, shape index: {}]
  %s2 = inlined_call_operand.hbm [shape: f32[16,32], index: 2, kind: input, shape index: {}]
  %s3 = inlined_call_operand.vmem [shape: f32[32,4], index: 3, kind: input, shape index: {}]
  %s4 = inlined_call_operand.vmem [shape: f32[4,32], index: 4, kind: input, shape index: {}]
  %s5 = inlined_call_operand.vmem [shape: f32[4,32], index: 5, kind: input, shape index: {}]
  %s6 = inlined_call_operand.hbm [shape: f32[32,32], index: 6, kind: input, shape index: {}]
  %s7 = inlined_call_operand.vmem [shape: f32[1,32], index: 7, kind: input, shape index: {}]
  %s8 = inlined_call_operand.hbm [shape: f32[2,16,32], index: 8, kind: output, shape index: {}]
  %s9 = sld [smem:[#allocation0]]
  $region77: #{tpu_custom_call.1} parent=0
    _
  %s11 = ssub.s32 1, %s9
  %s12 = scalar_select 0, %s11, %s9
  $region1: #{tpu_custom_call.1} parent=0
    #allocation2 [shape = 'u8[16384]{0}', space=vmem, size = 0x4000, scoped, tag = 'input window, operand 1']
    #allocation3 [shape = 's32[2]{0}', space=sflag, size = 0x8, scoped, tag = 'scoped memory for tpu_custom_call.1']
    #allocation4 [shape = 's32[2]{0}', space=sflag, size = 0x8, scoped, tag = 'scoped memory for tpu_custom_call.1']
    #allocation5 [shape = 'u8[8192]{0}', space=vmem, size = 0x2000, scoped, tag = 'input window, operand 2, single buffered']
    #allocation6 [shape = 's32[1]{0}', space=sflag, size = 0x4, scoped, tag = 'scoped memory for tpu_custom_call.1']
    #allocation7 [shape = 'u8[16384]{0}', space=vmem, size = 0x4000, scoped, tag = 'input window, operand 6, single buffered']
    #allocation8 [shape = 'u8[16384]{0}', space=vmem, size = 0x4000, scoped, tag = 'output window, operand 0']
    %13 = vsyncpa [#allocation3], 0
    %s14 = scalar_lea.sflag [#allocation3], 1
    %15 = vsyncpa %s14, 0
    %16 = vsyncpa [#allocation6], 0
    %17 = vsyncpa [#allocation4], 0
    %s18 = scalar_lea.sflag [#allocation4], 1
    %19 = vsyncpa %s18, 0
    loop: start=0, step=1, limit=4
    $region2: #{tpu_custom_call.1} parent=1 // loop_pre_header
      _
    $region3: #{tpu_custom_call.1} parent=1 // loop_header
      %s21 = sphi 0, %s25
      %p22 = scmp.ge.s32.totalorder %s21, 4
      %s31 = sphi 0, %s33
      %s34 = sphi 0, %s31
      %s35 = sphi 0, %s34
      %s51 = sphi 0, %s35
      %s57 = sphi 0, %s59
      %s60 = sphi 0, %s57
      %s61 = sphi 0, %s60
      %s77 = sphi 0, %s61
      %s81 = sphi 0, %s81
      %s83 = sphi 0, %s81
      %s84 = sphi 0, %s83
      %s98 = sphi 0, %s84
      %s102 = sphi 0, %s102
      %s104 = sphi 0, %s102
      %s105 = sphi 0, %s104
      %s119 = sphi 0, %s105
      %s123 = sphi 0, %s123
      %s125 = sphi 0, %s123
      %s126 = sphi 0, %s125
      %s140 = sphi 0, %s126
      %s144 = sphi 0, %s144
      %s146 = sphi 0, %s144
      %s147 = sphi 0, %s146
      %s161 = sphi 0, %s147
      %s165 = sphi 0, %s165
      %s167 = sphi 0, %s165
      %s168 = sphi 0, %s167
      %s182 = sphi 0, %s168
      %s186 = sphi 0, %s186
      %s188 = sphi 0, %s186
      %s189 = sphi 0, %s188
      %s203 = sphi 0, %s189
      %s209 = sphi 0, %s211
      %s212 = sphi 0, %s209
      %s213 = sphi 0, %s212
      %s229 = sphi 0, %s213
    $region4: #{tpu_custom_call.1} parent=1 // loop_header_branch
      %24 = sbr.rel (%p22) target = $region8
    $region5: #{tpu_custom_call.1} parent=1 // loop_body
      %s26 = ssub.s32 %s21, 1
      %s27 = ssub.s32 %s21, 2
      %s28 = sadd.s32 %s21, 1
      %s29 = ssub.s32 %s21, %s28
      %p30 = scmp.eq.s32.totalorder %s29, 0
      %s32 = sadd.s32 %s31, 1
      %s33 = scalar_select %p30, %s31, %s32
      %p36 = pneg %p30
      %p37 = scmp.eq.s32.totalorder %s21, 1
      %p38 = por %p36, %p37
      %p39 = scmp.ne.s32.totalorder %s31, %s34
      %p40 = scmp.eq.s32.totalorder %s21, 0
      %p41 = por %p39, %p40
      %p42 = scmp.ne.s32.totalorder %s31, %s34
      %p43 = scmp.eq.s32.totalorder %s26, 1
      %p44 = por %p42, %p43
      %p45 = scmp.ne.s32.totalorder %s34, %s35
      %p46 = scmp.eq.s32.totalorder %s26, 0
      %p47 = por %p45, %p46
      %p48 = scmp.ne.s32.totalorder %s34, %s35
      %p49 = scmp.eq.s32.totalorder %s27, 1
      %p50 = por %p48, %p49
      %p52 = scmp.ne.s32.totalorder %s35, %s51
      %p53 = scmp.eq.s32.totalorder %s27, 0
      %p54 = por %p52, %p53
      %s55 = ssub.s32 %s21, %s28
      %p56 = scmp.eq.s32.totalorder %s55, 0
      %s58 = sadd.s32 %s57, 1
      %s59 = scalar_select %p56, %s57, %s58
      %p62 = pneg %p56
      %p63 = scmp.eq.s32.totalorder %s21, 1
      %p64 = por %p62, %p63
      %p65 = scmp.ne.s32.totalorder %s57, %s60
      %p66 = scmp.eq.s32.totalorder %s21, 0
      %p67 = por %p65, %p66
      %p68 = scmp.ne.s32.totalorder %s57, %s60
      %p69 = scmp.eq.s32.totalorder %s26, 1
      %p70 = por %p68, %p69
      %p71 = scmp.ne.s32.totalorder %s60, %s61
      %p72 = scmp.eq.s32.totalorder %s26, 0
      %p73 = por %p71, %p72
      %p74 = scmp.ne.s32.totalorder %s60, %s61
      %p75 = scmp.eq.s32.totalorder %s27, 1
      %p76 = por %p74, %p75
      %p78 = scmp.ne.s32.totalorder %s61, %s77
      %p79 = scmp.eq.s32.totalorder %s27, 0
      %p80 = por %p78, %p79
      %s82 = sadd.s32 %s81, 1
      %p85 = scmp.eq.s32.totalorder %s21, 1
      %p86 = scmp.ne.s32.totalorder %s81, %s83
      %p87 = scmp.eq.s32.totalorder %s21, 0
      %p88 = por %p86, %p87
      %p89 = scmp.ne.s32.totalorder %s81, %s83
      %p90 = scmp.eq.s32.totalorder %s26, 1
      %p91 = por %p89, %p90
      %p92 = scmp.ne.s32.totalorder %s83, %s84
      %p93 = scmp.eq.s32.totalorder %s26, 0
      %p94 = por %p92, %p93
      %p95 = scmp.ne.s32.totalorder %s83, %s84
      %p96 = scmp.eq.s32.totalorder %s27, 1
      %p97 = por %p95, %p96
      %p99 = scmp.ne.s32.totalorder %s84, %s98
      %p100 = scmp.eq.s32.totalorder %s27, 0
      %p101 = por %p99, %p100
      %s103 = sadd.s32 %s102, 1
      %p106 = scmp.eq.s32.totalorder %s21, 1
      %p107 = scmp.ne.s32.totalorder %s102, %s104
      %p108 = scmp.eq.s32.totalorder %s21, 0
      %p109 = por %p107, %p108
      %p110 = scmp.ne.s32.totalorder %s102, %s104
      %p111 = scmp.eq.s32.totalorder %s26, 1
      %p112 = por %p110, %p111
      %p113 = scmp.ne.s32.totalorder %s104, %s105
      %p114 = scmp.eq.s32.totalorder %s26, 0
      %p115 = por %p113, %p114
      %p116 = scmp.ne.s32.totalorder %s104, %s105
      %p117 = scmp.eq.s32.totalorder %s27, 1
      %p118 = por %p116, %p117
      %p120 = scmp.ne.s32.totalorder %s105, %s119
      %p121 = scmp.eq.s32.totalorder %s27, 0
      %p122 = por %p120, %p121
      %s124 = sadd.s32 %s123, 1
      %p127 = scmp.eq.s32.totalorder %s21, 1
      %p128 = scmp.ne.s32.totalorder %s123, %s125
      %p129 = scmp.eq.s32.totalorder %s21, 0
      %p130 = por %p128, %p129
      %p131 = scmp.ne.s32.totalorder %s123, %s125
      %p132 = scmp.eq.s32.totalorder %s26, 1
      %p133 = por %p131, %p132
      %p134 = scmp.ne.s32.totalorder %s125, %s126
      %p135 = scmp.eq.s32.totalorder %s26, 0
      %p136 = por %p134, %p135
      %p137 = scmp.ne.s32.totalorder %s125, %s126
      %p138 = scmp.eq.s32.totalorder %s27, 1
      %p139 = por %p137, %p138
      %p141 = scmp.ne.s32.totalorder %s126, %s140
      %p142 = scmp.eq.s32.totalorder %s27, 0
      %p143 = por %p141, %p142
      %s145 = sadd.s32 %s144, 1
      %p148 = scmp.eq.s32.totalorder %s21, 1
      %p149 = scmp.ne.s32.totalorder %s144, %s146
      %p150 = scmp.eq.s32.totalorder %s21, 0
      %p151 = por %p149, %p150
      %p152 = scmp.ne.s32.totalorder %s144, %s146
      %p153 = scmp.eq.s32.totalorder %s26, 1
      %p154 = por %p152, %p153
      %p155 = scmp.ne.s32.totalorder %s146, %s147
      %p156 = scmp.eq.s32.totalorder %s26, 0
      %p157 = por %p155, %p156
      %p158 = scmp.ne.s32.totalorder %s146, %s147
      %p159 = scmp.eq.s32.totalorder %s27, 1
      %p160 = por %p158, %p159
      %p162 = scmp.ne.s32.totalorder %s147, %s161
      %p163 = scmp.eq.s32.totalorder %s27, 0
      %p164 = por %p162, %p163
      %s166 = sadd.s32 %s165, 1
      %p169 = scmp.eq.s32.totalorder %s21, 1
      %p170 = scmp.ne.s32.totalorder %s165, %s167
      %p171 = scmp.eq.s32.totalorder %s21, 0
      %p172 = por %p170, %p171
      %p173 = scmp.ne.s32.totalorder %s165, %s167
      %p174 = scmp.eq.s32.totalorder %s26, 1
      %p175 = por %p173, %p174
      %p176 = scmp.ne.s32.totalorder %s167, %s168
      %p177 = scmp.eq.s32.totalorder %s26, 0
      %p178 = por %p176, %p177
      %p179 = scmp.ne.s32.totalorder %s167, %s168
      %p180 = scmp.eq.s32.totalorder %s27, 1
      %p181 = por %p179, %p180
      %p183 = scmp.ne.s32.totalorder %s168, %s182
      %p184 = scmp.eq.s32.totalorder %s27, 0
      %p185 = por %p183, %p184
      %s187 = sadd.s32 %s186, 1
      %p190 = scmp.eq.s32.totalorder %s21, 1
      %p191 = scmp.ne.s32.totalorder %s186, %s188
      %p192 = scmp.eq.s32.totalorder %s21, 0
      %p193 = por %p191, %p192
      %p194 = scmp.ne.s32.totalorder %s186, %s188
      %p195 = scmp.eq.s32.totalorder %s26, 1
      %p196 = por %p194, %p195
      %p197 = scmp.ne.s32.totalorder %s188, %s189
      %p198 = scmp.eq.s32.totalorder %s26, 0
      %p199 = por %p197, %p198
      %p200 = scmp.ne.s32.totalorder %s188, %s189
      %p201 = scmp.eq.s32.totalorder %s27, 1
      %p202 = por %p200, %p201
      %p204 = scmp.ne.s32.totalorder %s189, %s203
      %p205 = scmp.eq.s32.totalorder %s27, 0
      %p206 = por %p204, %p205
      %s207 = ssub.s32 %s21, %s28
      %p208 = scmp.eq.s32.totalorder %s207, 0
      %s210 = sadd.s32 %s209, 1
      %s211 = scalar_select %p208, %s209, %s210
      %p214 = pneg %p208
      %p215 = scmp.eq.s32.totalorder %s21, 1
      %p216 = por %p214, %p215
      %p217 = scmp.ne.s32.totalorder %s209, %s212
      %p218 = scmp.eq.s32.totalorder %s21, 0
      %p219 = por %p217, %p218
      %p220 = scmp.ne.s32.totalorder %s209, %s212
      %p221 = scmp.eq.s32.totalorder %s26, 1
      %p222 = por %p220, %p221
      %p223 = scmp.ne.s32.totalorder %s212, %s213
      %p224 = scmp.eq.s32.totalorder %s26, 0
      %p225 = por %p223, %p224
      %p226 = scmp.ne.s32.totalorder %s212, %s213
      %p227 = scmp.eq.s32.totalorder %s27, 1
      %p228 = por %p226, %p227
      %p230 = scmp.ne.s32.totalorder %s213, %s229
      %p231 = scmp.eq.s32.totalorder %s27, 0
      %p232 = por %p230, %p231
      %p233 = scmp.le.s32.totalorder 1, %s21
      %p234 = scmp.lt.s32.totalorder %s21, 3
      %p235 = pnand %p233, %p234
      %p236 = pneg %p235
      // Predicated region
      $region9: #{tpu_custom_call.1} parent=5 // pred_check
        _
      $region10: #{tpu_custom_call.1} parent=5 // pred_check_branch
        %238 = sbr.rel (%p235) target = $region12
      $region11: #{tpu_custom_call.1} parent=5 // pred_region
        %s239 = ssub.s32 %s21, 1
        // Predicated region
        $region13: #{tpu_custom_call.1} parent=11 // pred_check
          %p240 = pneg %p94
        $region14: #{tpu_custom_call.1} parent=11 // pred_check_branch
          %242 = sbr.rel (%p240) target = $region16
        $region15: #{tpu_custom_call.1} parent=11 // pred_region
          %s244 = ssub.s32 256, 256
          %245 = vsyncadd [#allocation6], %s244
          %s246 = sshll.u32 [#allocation5], 4
          %s247 = int_to_ptr.vmem [resolvable:$true] %s246
          %252 = dma.hbm_to_vmem [thread:$0]  %s2, 256, %s247, [#allocation6], 128, 128, 8
        $region16: #{tpu_custom_call.1} parent=11 // pred_fallthru
          _
        // Predicated region
        $region17: #{tpu_custom_call.1} parent=11 // pred_check
          %p253 = pneg %p115
        $region18: #{tpu_custom_call.1} parent=11 // pred_check_branch
          %255 = sbr.rel (%p253) target = $region20
        $region19: #{tpu_custom_call.1} parent=11 // pred_region
          _
        $region20: #{tpu_custom_call.1} parent=11 // pred_fallthru
          _
        // Predicated region
        $region21: #{tpu_custom_call.1} parent=11 // pred_check
          %p256 = pneg %p136
        $region22: #{tpu_custom_call.1} parent=11 // pred_check_branch
          %258 = sbr.rel (%p256) target = $region24
        $region23: #{tpu_custom_call.1} parent=11 // pred_region
          _
        $region24: #{tpu_custom_call.1} parent=11 // pred_fallthru
          _
        // Predicated region
        $region25: #{tpu_custom_call.1} parent=11 // pred_check
          %p259 = pneg %p157
        $region26: #{tpu_custom_call.1} parent=11 // pred_check_branch
          %261 = sbr.rel (%p259) target = $region28
        $region27: #{tpu_custom_call.1} parent=11 // pred_region
          _
        $region28: #{tpu_custom_call.1} parent=11 // pred_fallthru
          _
        // Predicated region
        $region29: #{tpu_custom_call.1} parent=11 // pred_check
          %p262 = pneg %p178
        $region30: #{tpu_custom_call.1} parent=11 // pred_check_branch
          %264 = sbr.rel (%p262) target = $region32
        $region31: #{tpu_custom_call.1} parent=11 // pred_region
          %s266 = ssub.s32 512, 512
          %267 = vsyncadd [#allocation6], %s266
          %s268 = sshll.u32 [#allocation7], 4
          %s269 = int_to_ptr.vmem [resolvable:$true] %s268
          %274 = dma.hbm_to_vmem [thread:$0]  %s6, 512, %s269, [#allocation6], 128, 128, 8
        $region32: #{tpu_custom_call.1} parent=11 // pred_fallthru
          _
        // Predicated region
        $region33: #{tpu_custom_call.1} parent=11 // pred_check
          %p275 = pneg %p199
        $region34: #{tpu_custom_call.1} parent=11 // pred_check_branch
          %277 = sbr.rel (%p275) target = $region36
        $region35: #{tpu_custom_call.1} parent=11 // pred_region
          _
        $region36: #{tpu_custom_call.1} parent=11 // pred_fallthru
          _
      $region12: #{tpu_custom_call.1} parent=5 // pred_fallthru
        _
      %p278 = scmp.lt.s32.totalorder %s21, 2
      // Predicated region
      $region37: #{tpu_custom_call.1} parent=5 // pred_check
        %p279 = pneg %p278
      $region38: #{tpu_custom_call.1} parent=5 // pred_check_branch
        %281 = sbr.rel (%p279) target = $region40
      $region39: #{tpu_custom_call.1} parent=5 // pred_region
        // Predicated region
        $region41: #{tpu_custom_call.1} parent=39 // pred_check
          %p282 = pneg %p41
        $region42: #{tpu_custom_call.1} parent=39 // pred_check_branch
          %284 = sbr.rel (%p282) target = $region44
        $region43: #{tpu_custom_call.1} parent=39 // pred_region
          %p285 = scmp.lt.s32.totalorder %s21, 1
          %s286 = scalar_select %p285, %s21, 1
          %s287 = smul.addr %s286, 2
          %s288 = smul.addr %s287, 8
          %s289 = scalar_lea.vmem %s0, %s288
        $region44: #{tpu_custom_call.1} parent=39 // pred_fallthru
          _
        // Predicated region
        $region45: #{tpu_custom_call.1} parent=39 // pred_check
          %p290 = pneg %p67
        $region46: #{tpu_custom_call.1} parent=39 // pred_check_branch
          %292 = sbr.rel (%p290) target = $region48
        $region47: #{tpu_custom_call.1} parent=39 // pred_region
          %s293 = sand.u32 %s57, 1
          %s294 = scalar_lea.sflag [#allocation3], %s293
          %s295 = sand.u32 %s57, 1
          %s296 = smul.addr %s295, 16
          %s297 = scalar_lea.vmem [#allocation2], %s296
          %s299 = ssub.s32 256, 256
          %300 = vsyncadd %s294, %s299
          %s301 = smul.addr %s21, 2
          %s302 = smul.addr %s301, 128
          %s303 = scalar_lea.hbm %s1, %s302
          %s304 = sshll.u32 %s297, 4
          %s305 = int_to_ptr.vmem [resolvable:$true] %s304
          %310 = dma.hbm_to_vmem [thread:$0]  %s303, 256, %s305, %s294, 128, 128, 8
        $region48: #{tpu_custom_call.1} parent=39 // pred_fallthru
          _
      $region40: #{tpu_custom_call.1} parent=5 // pred_fallthru
        _
      %p311 = scmp.le.s32.totalorder 1, %s21
      %p312 = scmp.lt.s32.totalorder %s21, 3
      %p313 = pnand %p311, %p312
      %p314 = pneg %p313
      // Predicated region
      $region49: #{tpu_custom_call.1} parent=5 // pred_check
        _
      $region50: #{tpu_custom_call.1} parent=5 // pred_check_branch
        %316 = sbr.rel (%p313) target = $region52
      $region51: #{tpu_custom_call.1} parent=5 // pred_region
        %s317 = ssub.s32 %s21, 1
        %s318 = sand.u32 %s60, 1
        %s319 = scalar_lea.sflag [#allocation3], %s318
        %s320 = sand.u32 %s60, 1
        %s321 = smul.addr %s320, 16
        %s322 = scalar_lea.vmem [#allocation2], %s321
        // Predicated region
        $region53: #{tpu_custom_call.1} parent=51 // pred_check
          %p323 = pneg %p73
        $region54: #{tpu_custom_call.1} parent=51 // pred_check_branch
          %325 = sbr.rel (%p323) target = $region56
        $region55: #{tpu_custom_call.1} parent=51 // pred_region
          %326 = dma.done %s319, 256
        $region56: #{tpu_custom_call.1} parent=51 // pred_fallthru
          _
        // Predicated region
        $region57: #{tpu_custom_call.1} parent=51 // pred_check
          %p327 = pneg %p94
        $region58: #{tpu_custom_call.1} parent=51 // pred_check_branch
          %329 = sbr.rel (%p327) target = $region60
        $region59: #{tpu_custom_call.1} parent=51 // pred_region
          %330 = dma.done [#allocation6], 256
        $region60: #{tpu_custom_call.1} parent=51 // pred_fallthru
          _
        // Predicated region
        $region61: #{tpu_custom_call.1} parent=51 // pred_check
          %p331 = pneg %p178
        $region62: #{tpu_custom_call.1} parent=51 // pred_check_branch
          %333 = sbr.rel (%p331) target = $region64
        $region63: #{tpu_custom_call.1} parent=51 // pred_region
          %334 = dma.done [#allocation6], 512
        $region64: #{tpu_custom_call.1} parent=51 // pred_fallthru
          _
        %p335 = scmp.lt.s32.totalorder %s26, 1
        %s336 = scalar_select %p335, %s26, 1
        %s337 = smul.addr %s336, 2
        %s338 = smul.addr %s337, 8
        %s339 = scalar_lea.vmem %s0, %s338
        %p340 = pneg %p47
        %p341 = pneg %p44
        %s342 = sand.u32 %s60, 1
        %s343 = scalar_lea.sflag [#allocation3], %s342
        %s344 = sand.u32 %s60, 1
        %s345 = smul.addr %s344, 16
        %s346 = scalar_lea.vmem [#allocation2], %s345
        %p347 = pneg %p73
        %p348 = pneg %p70
        %p349 = pneg %p94
        %p350 = pneg %p91
        %p351 = pneg %p115
        %p352 = pneg %p112
        %p353 = pneg %p136
        %p354 = pneg %p133
        %p355 = pneg %p157
        %p356 = pneg %p154
        %p357 = pneg %p178
        %p358 = pneg %p175
        %p359 = pneg %p199
        %p360 = pneg %p196
        %p361 = pneg %p225
        %p362 = pneg %p222
        %s363 = sand.u32 %s212, 1
        %s364 = scalar_lea.sflag [#allocation4], %s363
        %s365 = sand.u32 %s212, 1
        %s366 = smul.addr %s365, 16
        %s367 = scalar_lea.vmem [#allocation8], %s366
        %p368 = scmp.lt.s32.totalorder %s26, 1
        %s369 = scalar_select %p368, %s26, 1
        %s370 = smul.addr %s369, 2
        %s371 = smul.addr %s370, 8
        %s372 = scalar_lea.vmem %s0, %s371
        %v373 = vld [vmem:[%s372] sm:$0xff]
        %v374 = vld [vmem:[%s372 + $0x8] sm:$0xff]
        %v375 = vld [vmem:[%s322] sm:$0xff]
        %v376 = vld [vmem:[%s322 + $0x8] sm:$0xff]
        %v377 = vld [vmem:[#allocation5] sm:$0xff]
        %v378 = vld [vmem:[#allocation5 + $0x8] sm:$0xff]
        %v379 = vld [vmem:[%s3] sm:$0xff]
        %v380 = vld [vmem:[%s3 + $0x8] sm:$0xff]
        %v381 = vld [vmem:[%s3 + $0x10] sm:$0xff]
        %v382 = vld [vmem:[%s3 + $0x18] sm:$0xff]
        %v383 = vld [vmem:[%s4] sm:$0xf]
        %v384 = vld [vmem:[%s5] sm:$0xf]
        %v385 = vld [vmem:[#allocation7] sm:$0xff]
        %v386 = vld [vmem:[#allocation7 + $0x8] sm:$0xff]
        %v387 = vld [vmem:[#allocation7 + $0x10] sm:$0xff]
        %v388 = vld [vmem:[#allocation7 + $0x18] sm:$0xff]
        %v389 = vld [vmem:[%s7] sm:$0x1]
        %vm390 = vcmask 130048
        %v392 = vsel %vm390, %v373, 0
        %v395 = vsel %vm390, %v374, 0
        %397 = vmatprep.subr.mxu0 0.0
        %398 = vmatpush1.msra.mxu0 %v377
        %399 = vmatprep.subr.mxu0 0.0
        %400 = vmatpush1.msra.mxu0 %v378
        %401 = vmatprep.subr.mxu0 0.0
        %402 = vmatpush1.msra.mxu0 0.0
        %403 = vmatprep.subr.mxu0 0.0
        %404 = vmatpush1.msra.mxu0 0.0
        %405 = vmatprep.subr.mxu0 0.0
        %406 = vmatpush1.msra.mxu0 0.0
        %407 = vmatprep.subr.mxu0 0.0
        %408 = vmatpush1.msra.mxu0 0.0
        %409 = vmatprep.subr.mxu0 0.0
        %410 = vmatpush1.msra.mxu0 0.0
        %411 = vmatprep.subr.mxu0 0.0
        %412 = vmatpush1.msra.mxu0 0.0
        %413 = vmatprep.subr.mxu0 0.0
        %414 = vmatpush1.msra.mxu0 0.0
        %415 = vmatprep.subr.mxu0 0.0
        %416 = vmatpush1.msra.mxu0 0.0
        %417 = vmatprep.subr.mxu0 0.0
        %418 = vmatpush1.msra.mxu0 0.0
        %419 = vmatprep.subr.mxu0 0.0
        %420 = vmatpush1.msra.mxu0 0.0
        %421 = vmatprep.subr.mxu0 0.0
        %422 = vmatpush1.msra.mxu0 0.0
        %423 = vmatprep.subr.mxu0 0.0
        %424 = vmatpush1.msra.mxu0 0.0
        %425 = vmatprep.subr.mxu0 0.0
        %426 = vmatpush1.msra.mxu0 0.0
        %427 = vmatprep.subr.mxu0 0.0
        %428 = vmatpush1.msra.mxu0 0.0
        %429 = vmatprep.subr.mxu0 0.0
        %430 = vmatpush1.msra.mxu0 0.0
        %431 = vmatprep.subr.mxu0 0.0
        %432 = vmatpush1.msra.mxu0 0.0
        %433 = vmatprep.subr.mxu0 0.0
        %434 = vmatpush1.msra.mxu0 0.0
        %435 = vmatprep.subr.mxu0 0.0
        %436 = vmatpush1.msra.mxu0 0.0
        %437 = vmatprep.subr.mxu0 0.0
        %438 = vmatpush1.msra.mxu0 0.0
        %439 = vmatprep.subr.mxu0 0.0
        %440 = vmatpush1.msra.mxu0 0.0
        %441 = vmatprep.subr.mxu0 0.0
        %442 = vmatpush1.msra.mxu0 0.0
        %443 = vmatprep.subr.mxu0 0.0
        %444 = vmatpush1.msra.mxu0 0.0
        %445 = vmatprep.subr.mxu0 0.0
        %446 = vmatpush1.msra.mxu0 0.0
        %447 = vmatprep.subr.mxu0 0.0
        %448 = vmatpush1.msra.mxu0 0.0
        %449 = vmatprep.subr.mxu0 0.0
        %450 = vmatpush1.msra.mxu0 0.0
        %451 = vmatprep.subr.mxu0 0.0
        %452 = vmatpush1.msra.mxu0 0.0
        %453 = vmatprep.subr.mxu0 0.0
        %454 = vmatpush1.msra.mxu0 0.0
        %455 = vmatprep.subr.mxu0 0.0
        %456 = vmatpush1.msra.mxu0 0.0
        %457 = vmatprep.subr.mxu0 0.0
        %458 = vmatpush1.msra.mxu0 0.0
        %459 = vmatprep.subr.mxu0 0.0
        %460 = vmatpush1.msra.mxu0 0.0
        %461 = vmatprep.mubr.f32.mxu0 0.0
        %462 = vmatmul.mubr.f32.gmra.mrb[0].mxu0 %v392
        %v463 = vpop.f32.mrb[0].mxu0
        %v464 = vadd.f32 0.0, %v463
        %v465 = vpop.f32.mrb[0].mxu0
        %466 = vmatprep.mubr.f32.mxu0 0.0
        %467 = vmatmul.mubr.f32.gmra.mrb[0].mxu0 %v395
        %v468 = vpop.f32.mrb[0].mxu0
        %v469 = vadd.f32 0.0, %v468
        %v470 = vpop.f32.mrb[0].mxu0
        %471 = vdwg.mxu0
        %vm472 = vcmask 261120
        %v474 = vsel %vm472, %v464, 0
        %v477 = vsel %vm472, %v469, 0
        %479 = vmatprep.subr.mxu0 0.0
        %480 = vmatpush1.msra.mxu0 %v379
        %481 = vmatprep.subr.mxu0 0.0
        %482 = vmatpush1.msra.mxu0 %v380
        %483 = vmatprep.subr.mxu0 0.0
        %484 = vmatpush1.msra.mxu0 %v381
        %485 = vmatprep.subr.mxu0 0.0
        %486 = vmatpush1.msra.mxu0 %v382
        %487 = vmatprep.subr.mxu0 0.0
        %488 = vmatpush1.msra.mxu0 0.0
        %489 = vmatprep.subr.mxu0 0.0
        %490 = vmatpush1.msra.mxu0 0.0
        %491 = vmatprep.subr.mxu0 0.0
        %492 = vmatpush1.msra.mxu0 0.0
        %493 = vmatprep.subr.mxu0 0.0
        %494 = vmatpush1.msra.mxu0 0.0
        %495 = vmatprep.subr.mxu0 0.0
        %496 = vmatpush1.msra.mxu0 0.0
        %497 = vmatprep.subr.mxu0 0.0
        %498 = vmatpush1.msra.mxu0 0.0
        %499 = vmatprep.subr.mxu0 0.0
        %500 = vmatpush1.msra.mxu0 0.0
        %501 = vmatprep.subr.mxu0 0.0
        %502 = vmatpush1.msra.mxu0 0.0
        %503 = vmatprep.subr.mxu0 0.0
        %504 = vmatpush1.msra.mxu0 0.0
        %505 = vmatprep.subr.mxu0 0.0
        %506 = vmatpush1.msra.mxu0 0.0
        %507 = vmatprep.subr.mxu0 0.0
        %508 = vmatpush1.msra.mxu0 0.0
        %509 = vmatprep.subr.mxu0 0.0
        %510 = vmatpush1.msra.mxu0 0.0
        %511 = vmatprep.subr.mxu0 0.0
        %512 = vmatpush1.msra.mxu0 0.0
        %513 = vmatprep.subr.mxu0 0.0
        %514 = vmatpush1.msra.mxu0 0.0
        %515 = vmatprep.subr.mxu0 0.0
        %516 = vmatpush1.msra.mxu0 0.0
        %517 = vmatprep.subr.mxu0 0.0
        %518 = vmatpush1.msra.mxu0 0.0
        %519 = vmatprep.subr.mxu0 0.0
        %520 = vmatpush1.msra.mxu0 0.0
        %521 = vmatprep.subr.mxu0 0.0
        %522 = vmatpush1.msra.mxu0 0.0
        %523 = vmatprep.subr.mxu0 0.0
        %524 = vmatpush1.msra.mxu0 0.0
        %525 = vmatprep.subr.mxu0 0.0
        %526 = vmatpush1.msra.mxu0 0.0
        %527 = vmatprep.subr.mxu0 0.0
        %528 = vmatpush1.msra.mxu0 0.0
        %529 = vmatprep.subr.mxu0 0.0
        %530 = vmatpush1.msra.mxu0 0.0
        %531 = vmatprep.subr.mxu0 0.0
        %532 = vmatpush1.msra.mxu0 0.0
        %533 = vmatprep.subr.mxu0 0.0
        %534 = vmatpush1.msra.mxu0 0.0
        %535 = vmatprep.subr.mxu0 0.0
        %536 = vmatpush1.msra.mxu0 0.0
        %537 = vmatprep.subr.mxu0 0.0
        %538 = vmatpush1.msra.mxu0 0.0
        %539 = vmatprep.subr.mxu0 0.0
        %540 = vmatpush1.msra.mxu0 0.0
        %541 = vmatprep.subr.mxu0 0.0
        %542 = vmatpush1.msra.mxu0 0.0
        %543 = vmatprep.mubr.f32.mxu0 0.0
        %544 = vmatmul.mubr.f32.gmra.mrb[0].mxu0 %v474
        %v545 = vpop.f32.mrb[0].mxu0
        %v546 = vadd.f32 0.0, %v545
        %v547 = vpop.f32.mrb[0].mxu0
        %548 = vmatprep.mubr.f32.mxu0 0.0
        %549 = vmatmul.mubr.f32.gmra.mrb[0].mxu0 %v477
        %v550 = vpop.f32.mrb[0].mxu0
        %v551 = vadd.f32 0.0, %v550
        %v552 = vpop.f32.mrb[0].mxu0
        %553 = vdwg.mxu0
        %v555 = vsel %vm472, %v383, 0
        %557 = vmatprep.subr.mxu0 0.0
        %558 = vmatpush1.xpose.msra.mxu0 %v474
        %559 = vmatprep.subr.mxu0 0.0
        %560 = vmatpush1.xpose.msra.mxu0 %v477
        %561 = vmatprep.subr.mxu0 0.0
        %562 = vmatpush1.xpose.msra.mxu0 0.0
        %563 = vmatprep.subr.mxu0 0.0
        %564 = vmatpush1.xpose.msra.mxu0 0.0
        %565 = vmatprep.subr.mxu0 0.0
        %566 = vmatpush1.xpose.msra.mxu0 0.0
        %567 = vmatprep.subr.mxu0 0.0
        %568 = vmatpush1.xpose.msra.mxu0 0.0
        %569 = vmatprep.subr.mxu0 0.0
        %570 = vmatpush1.xpose.msra.mxu0 0.0
        %571 = vmatprep.subr.mxu0 0.0
        %572 = vmatpush1.xpose.msra.mxu0 0.0
        %573 = vmatprep.subr.mxu0 0.0
        %574 = vmatpush1.xpose.msra.mxu0 0.0
        %575 = vmatprep.subr.mxu0 0.0
        %576 = vmatpush1.xpose.msra.mxu0 0.0
        %577 = vmatprep.subr.mxu0 0.0
        %578 = vmatpush1.xpose.msra.mxu0 0.0
        %579 = vmatprep.subr.mxu0 0.0
        %580 = vmatpush1.xpose.msra.mxu0 0.0
        %581 = vmatprep.subr.mxu0 0.0
        %582 = vmatpush1.xpose.msra.mxu0 0.0
        %583 = vmatprep.subr.mxu0 0.0
        %584 = vmatpush1.xpose.msra.mxu0 0.0
        %585 = vmatprep.subr.mxu0 0.0
        %586 = vmatpush1.xpose.msra.mxu0 0.0
        %587 = vmatprep.subr.mxu0 0.0
        %588 = vmatpush1.xpose.msra.mxu0 0.0
        %589 = vmatprep.subr.mxu0 0.0
        %590 = vmatpush1.xpose.msra.mxu0 0.0
        %591 = vmatprep.subr.mxu0 0.0
        %592 = vmatpush1.xpose.msra.mxu0 0.0
        %593 = vmatprep.subr.mxu0 0.0
        %594 = vmatpush1.xpose.msra.mxu0 0.0
        %595 = vmatprep.subr.mxu0 0.0
        %596 = vmatpush1.xpose.msra.mxu0 0.0
        %597 = vmatprep.subr.mxu0 0.0
        %598 = vmatpush1.xpose.msra.mxu0 0.0
        %599 = vmatprep.subr.mxu0 0.0
        %600 = vmatpush1.xpose.msra.mxu0 0.0
        %601 = vmatprep.subr.mxu0 0.0
        %602 = vmatpush1.xpose.msra.mxu0 0.0
        %603 = vmatprep.subr.mxu0 0.0
        %604 = vmatpush1.xpose.msra.mxu0 0.0
        %605 = vmatprep.subr.mxu0 0.0
        %606 = vmatpush1.xpose.msra.mxu0 0.0
        %607 = vmatprep.subr.mxu0 0.0
        %608 = vmatpush1.xpose.msra.mxu0 0.0
        %609 = vmatprep.subr.mxu0 0.0
        %610 = vmatpush1.xpose.msra.mxu0 0.0
        %611 = vmatprep.subr.mxu0 0.0
        %612 = vmatpush1.xpose.msra.mxu0 0.0
        %613 = vmatprep.subr.mxu0 0.0
        %614 = vmatpush1.xpose.msra.mxu0 0.0
        %615 = vmatprep.subr.mxu0 0.0
        %616 = vmatpush1.xpose.msra.mxu0 0.0
        %617 = vmatprep.subr.mxu0 0.0
        %618 = vmatpush1.xpose.msra.mxu0 0.0
        %619 = vmatprep.subr.mxu0 0.0
        %620 = vmatpush1.xpose.msra.mxu0 0.0
        %621 = vmatprep.mubr.f32.mxu0 0.0
        %622 = vmatmul.mubr.f32.gmra.mrb[0].mxu0 %v555
        %v623 = vpop.f32.mrb[0].mxu0
        %v624 = vadd.f32 0.0, %v623
        %v625 = vpop.f32.mrb[0].mxu0
        %626 = vdwg.mxu0
        %vm627 = vcmp.gt.f32.partialorder %v375, 0.0
        %vm628 = vcmp.gt.f32.partialorder %v376, 0.0
        %630 = vset.pattern.permute.xlu0 0
        %631 = vperm.xlu0 %630, %v546
        %v632 = vpop.permute.xlu0 %631
        %635 = vset.pattern.permute.xlu0 0
        %636 = vperm.xlu0 %635, %v551
        %v637 = vpop.permute.xlu0 %636
        %v639 = vlaneseq
        %v640 = vshrl.u32 %v639, 7
        %v641 = vsub.s32 0, %v640
        %v642 = vrot.slane %v624, %v641
        %v643 = vadd.f32 %v632, %v642
        %v644 = vadd.f32 %v637, %v642
        %vm645 = vcmp.gt.f32.partialorder %v643, 0.0
        %vm646 = vcmp.gt.f32.partialorder %v644, 0.0
        %v647 = vmul.f32 %v643, 0.2
        %v648 = vmul.f32 %v644, 0.2
        %v649 = vsel %vm645, %v643, %v647
        %v650 = vsel %vm646, %v644, %v648
        %v651 = vsel %vm627, %v649, -9e+15
        %v652 = vsel %vm628, %v650, -9e+15
        %v653 = vsel %vm390, %v651, -inf
        %654 = vmax.xlane.f32.xlu0 %v653
        %v655 = vpop.xlane.xlu0 %654
        %v656 = vsel %vm390, %v652, -inf
        %657 = vmax.xlane.f32.xlu0 %v656
        %v658 = vpop.xlane.xlu0 %657
        %v659 = vsub.f32 %v651, %v655
        %v660 = vsub.f32 %v652, %v658
        %v661 = vmul.f32 %v659, 1.442695
        %v662 = vpow.pop %v661
        %v663 = vmul.f32 %v660, 1.442695
        %v664 = vpow.pop %v663
        %v665 = vsel %vm390, %v662, 0.0
        %666 = vadd.xlane.f32.xlu0 %v665
        %v667 = vpop.xlane.xlu0 %666
        %v668 = vsel %vm390, %v664, 0.0
        %669 = vadd.xlane.f32.xlu0 %v668
        %v670 = vpop.xlane.xlu0 %669
        %v671 = vrcp.pop %v667
        %v672 = vrcp.pop %v670
        %v673 = vmul.f32 %v667, %v671
        %v674 = vmul.f32 %v670, %v672
        %v675 = vsub.f32 2.0, %v673
        %v676 = vsub.f32 2.0, %v674
        %v677 = vmul.f32 %v671, %v675
        %v678 = vmul.f32 %v672, %v676
        %v679 = vmul.f32 %v662, %v677
        %v680 = vmul.f32 %v664, %v678
        %v682 = vsel %vm390, %v679, 0
        %v685 = vsel %vm390, %v680, 0
        %687 = vmatprep.subr.mxu0 0.0
        %688 = vmatpush1.msra.mxu0 %v464
        %689 = vmatprep.subr.mxu0 0.0
        %690 = vmatpush1.msra.mxu0 %v469
        %691 = vmatprep.subr.mxu0 0.0
        %692 = vmatpush1.msra.mxu0 0.0
        %693 = vmatprep.subr.mxu0 0.0
        %694 = vmatpush1.msra.mxu0 0.0
        %695 = vmatprep.subr.mxu0 0.0
        %696 = vmatpush1.msra.mxu0 0.0
        %697 = vmatprep.subr.mxu0 0.0
        %698 = vmatpush1.msra.mxu0 0.0
        %699 = vmatprep.subr.mxu0 0.0
        %700 = vmatpush1.msra.mxu0 0.0
        %701 = vmatprep.subr.mxu0 0.0
        %702 = vmatpush1.msra.mxu0 0.0
        %703 = vmatprep.subr.mxu0 0.0
        %704 = vmatpush1.msra.mxu0 0.0
        %705 = vmatprep.subr.mxu0 0.0
        %706 = vmatpush1.msra.mxu0 0.0
        %707 = vmatprep.subr.mxu0 0.0
        %708 = vmatpush1.msra.mxu0 0.0
        %709 = vmatprep.subr.mxu0 0.0
        %710 = vmatpush1.msra.mxu0 0.0
        %711 = vmatprep.subr.mxu0 0.0
        %712 = vmatpush1.msra.mxu0 0.0
        %713 = vmatprep.subr.mxu0 0.0
        %714 = vmatpush1.msra.mxu0 0.0
        %715 = vmatprep.subr.mxu0 0.0
        %716 = vmatpush1.msra.mxu0 0.0
        %717 = vmatprep.subr.mxu0 0.0
        %718 = vmatpush1.msra.mxu0 0.0
        %719 = vmatprep.subr.mxu0 0.0
        %720 = vmatpush1.msra.mxu0 0.0
        %721 = vmatprep.subr.mxu0 0.0
        %722 = vmatpush1.msra.mxu0 0.0
        %723 = vmatprep.subr.mxu0 0.0
        %724 = vmatpush1.msra.mxu0 0.0
        %725 = vmatprep.subr.mxu0 0.0
        %726 = vmatpush1.msra.mxu0 0.0
        %727 = vmatprep.subr.mxu0 0.0
        %728 = vmatpush1.msra.mxu0 0.0
        %729 = vmatprep.subr.mxu0 0.0
        %730 = vmatpush1.msra.mxu0 0.0
        %731 = vmatprep.subr.mxu0 0.0
        %732 = vmatpush1.msra.mxu0 0.0
        %733 = vmatprep.subr.mxu0 0.0
        %734 = vmatpush1.msra.mxu0 0.0
        %735 = vmatprep.subr.mxu0 0.0
        %736 = vmatpush1.msra.mxu0 0.0
        %737 = vmatprep.subr.mxu0 0.0
        %738 = vmatpush1.msra.mxu0 0.0
        %739 = vmatprep.subr.mxu0 0.0
        %740 = vmatpush1.msra.mxu0 0.0
        %741 = vmatprep.subr.mxu0 0.0
        %742 = vmatpush1.msra.mxu0 0.0
        %743 = vmatprep.subr.mxu0 0.0
        %744 = vmatpush1.msra.mxu0 0.0
        %745 = vmatprep.subr.mxu0 0.0
        %746 = vmatpush1.msra.mxu0 0.0
        %747 = vmatprep.subr.mxu0 0.0
        %748 = vmatpush1.msra.mxu0 0.0
        %749 = vmatprep.subr.mxu0 0.0
        %750 = vmatpush1.msra.mxu0 0.0
        %751 = vmatprep.mubr.f32.mxu0 0.0
        %752 = vmatmul.mubr.f32.gmra.mrb[0].mxu0 %v682
        %v753 = vpop.f32.mrb[0].mxu0
        %v754 = vadd.f32 0.0, %v753
        %v755 = vpop.f32.mrb[0].mxu0
        %756 = vmatprep.mubr.f32.mxu0 0.0
        %757 = vmatmul.mubr.f32.gmra.mrb[0].mxu0 %v685
        %v758 = vpop.f32.mrb[0].mxu0
        %v759 = vadd.f32 0.0, %v758
        %v760 = vpop.f32.mrb[0].mxu0
        %761 = vdwg.mxu0
        %vm762 = vcmp.gt.f32.partialorder %v754, 0.0
        %vm763 = vcmp.gt.f32.partialorder %v759, 0.0
        %v764 = vmin.f32 %v754, 0.0
        %v765 = vmin.f32 %v759, 0.0
        %v766 = vmul.f32 %v764, 1.442695
        %v767 = vpow.pop %v766
        %v768 = vmul.f32 %v765, 1.442695
        %v769 = vpow.pop %v768
        %v770 = vsub.f32 %v767, 1.0
        %v771 = vsub.f32 %v769, 1.0
        %v772 = vsel %vm762, %v754, %v770
        %v773 = vsel %vm763, %v759, %v771
        %v774 = vlaneseq
        %v775 = vshrl.u32 %v774, 7
        %v776 = vsub.s32 0, %v775
        %v777 = vrot.slane %v384, %v776
        %v778 = vmul.f32 %v772, %v777
        %v779 = vmul.f32 %v773, %v777
        %v780 = vadd.f32 %v778, 0.0
        %v781 = vadd.f32 %v779, 0.0
        %782 = vset.pattern.permute.xlu0 1
        %783 = vperm.xlu0 %782, %v546
        %v784 = vpop.permute.xlu0 %783
        %786 = vset.pattern.permute.xlu0 1
        %787 = vperm.xlu0 %786, %v551
        %v788 = vpop.permute.xlu0 %787
        %v790 = vlaneseq
        %v791 = vshrl.u32 %v790, 7
        %v792 = vsub.s32 1, %v791
        %v793 = vrot.slane %v624, %v792
        %v794 = vadd.f32 %v784, %v793
        %v795 = vadd.f32 %v788, %v793
        %vm796 = vcmp.gt.f32.partialorder %v794, 0.0
        %vm797 = vcmp.gt.f32.partialorder %v795, 0.0
        %v798 = vmul.f32 %v794, 0.2
        %v799 = vmul.f32 %v795, 0.2
        %v800 = vsel %vm796, %v794, %v798
        %v801 = vsel %vm797, %v795, %v799
        %v802 = vsel %vm627, %v800, -9e+15
        %v803 = vsel %vm628, %v801, -9e+15
        %v804 = vsel %vm390, %v802, -inf
        %805 = vmax.xlane.f32.xlu0 %v804
        %v806 = vpop.xlane.xlu0 %805
        %v807 = vsel %vm390, %v803, -inf
        %808 = vmax.xlane.f32.xlu0 %v807
        %v809 = vpop.xlane.xlu0 %808
        %v810 = vsub.f32 %v802, %v806
        %v811 = vsub.f32 %v803, %v809
        %v812 = vmul.f32 %v810, 1.442695
        %v813 = vpow.pop %v812
        %v814 = vmul.f32 %v811, 1.442695
        %v815 = vpow.pop %v814
        %v816 = vsel %vm390, %v813, 0.0
        %817 = vadd.xlane.f32.xlu0 %v816
        %v818 = vpop.xlane.xlu0 %817
        %v819 = vsel %vm390, %v815, 0.0
        %820 = vadd.xlane.f32.xlu0 %v819
        %v821 = vpop.xlane.xlu0 %820
        %v822 = vrcp.pop %v818
        %v823 = vrcp.pop %v821
        %v824 = vmul.f32 %v818, %v822
        %v825 = vmul.f32 %v821, %v823
        %v826 = vsub.f32 2.0, %v824
        %v827 = vsub.f32 2.0, %v825
        %v828 = vmul.f32 %v822, %v826
        %v829 = vmul.f32 %v823, %v827
        %v830 = vmul.f32 %v813, %v828
        %v831 = vmul.f32 %v815, %v829
        %v833 = vsel %vm390, %v830, 0
        %v836 = vsel %vm390, %v831, 0
        %838 = vmatprep.subr.mxu0 0.0
        %839 = vmatpush1.msra.mxu0 %v464
        %840 = vmatprep.subr.mxu0 0.0
        %841 = vmatpush1.msra.mxu0 %v469
        %842 = vmatprep.subr.mxu0 0.0
        %843 = vmatpush1.msra.mxu0 0.0
        %844 = vmatprep.subr.mxu0 0.0
        %845 = vmatpush1.msra.mxu0 0.0
        %846 = vmatprep.subr.mxu0 0.0
        %847 = vmatpush1.msra.mxu0 0.0
        %848 = vmatprep.subr.mxu0 0.0
        %849 = vmatpush1.msra.mxu0 0.0
        %850 = vmatprep.subr.mxu0 0.0
        %851 = vmatpush1.msra.mxu0 0.0
        %852 = vmatprep.subr.mxu0 0.0
        %853 = vmatpush1.msra.mxu0 0.0
        %854 = vmatprep.subr.mxu0 0.0
        %855 = vmatpush1.msra.mxu0 0.0
        %856 = vmatprep.subr.mxu0 0.0
        %857 = vmatpush1.msra.mxu0 0.0
        %858 = vmatprep.subr.mxu0 0.0
        %859 = vmatpush1.msra.mxu0 0.0
        %860 = vmatprep.subr.mxu0 0.0
        %861 = vmatpush1.msra.mxu0 0.0
        %862 = vmatprep.subr.mxu0 0.0
        %863 = vmatpush1.msra.mxu0 0.0
        %864 = vmatprep.subr.mxu0 0.0
        %865 = vmatpush1.msra.mxu0 0.0
        %866 = vmatprep.subr.mxu0 0.0
        %867 = vmatpush1.msra.mxu0 0.0
        %868 = vmatprep.subr.mxu0 0.0
        %869 = vmatpush1.msra.mxu0 0.0
        %870 = vmatprep.subr.mxu0 0.0
        %871 = vmatpush1.msra.mxu0 0.0
        %872 = vmatprep.subr.mxu0 0.0
        %873 = vmatpush1.msra.mxu0 0.0
        %874 = vmatprep.subr.mxu0 0.0
        %875 = vmatpush1.msra.mxu0 0.0
        %876 = vmatprep.subr.mxu0 0.0
        %877 = vmatpush1.msra.mxu0 0.0
        %878 = vmatprep.subr.mxu0 0.0
        %879 = vmatpush1.msra.mxu0 0.0
        %880 = vmatprep.subr.mxu0 0.0
        %881 = vmatpush1.msra.mxu0 0.0
        %882 = vmatprep.subr.mxu0 0.0
        %883 = vmatpush1.msra.mxu0 0.0
        %884 = vmatprep.subr.mxu0 0.0
        %885 = vmatpush1.msra.mxu0 0.0
        %886 = vmatprep.subr.mxu0 0.0
        %887 = vmatpush1.msra.mxu0 0.0
        %888 = vmatprep.subr.mxu0 0.0
        %889 = vmatpush1.msra.mxu0 0.0
        %890 = vmatprep.subr.mxu0 0.0
        %891 = vmatpush1.msra.mxu0 0.0
        %892 = vmatprep.subr.mxu0 0.0
        %893 = vmatpush1.msra.mxu0 0.0
        %894 = vmatprep.subr.mxu0 0.0
        %895 = vmatpush1.msra.mxu0 0.0
        %896 = vmatprep.subr.mxu0 0.0
        %897 = vmatpush1.msra.mxu0 0.0
        %898 = vmatprep.subr.mxu0 0.0
        %899 = vmatpush1.msra.mxu0 0.0
        %900 = vmatprep.subr.mxu0 0.0
        %901 = vmatpush1.msra.mxu0 0.0
        %902 = vmatprep.mubr.f32.mxu0 0.0
        %903 = vmatmul.mubr.f32.gmra.mrb[0].mxu0 %v833
        %v904 = vpop.f32.mrb[0].mxu0
        %v905 = vadd.f32 0.0, %v904
        %v906 = vpop.f32.mrb[0].mxu0
        %907 = vmatprep.mubr.f32.mxu0 0.0
        %908 = vmatmul.mubr.f32.gmra.mrb[0].mxu0 %v836
        %v909 = vpop.f32.mrb[0].mxu0
        %v910 = vadd.f32 0.0, %v909
        %v911 = vpop.f32.mrb[0].mxu0
        %912 = vdwg.mxu0
        %vm913 = vcmp.gt.f32.partialorder %v905, 0.0
        %vm914 = vcmp.gt.f32.partialorder %v910, 0.0
        %v915 = vmin.f32 %v905, 0.0
        %v916 = vmin.f32 %v910, 0.0
        %v917 = vmul.f32 %v915, 1.442695
        %v918 = vpow.pop %v917
        %v919 = vmul.f32 %v916, 1.442695
        %v920 = vpow.pop %v919
        %v921 = vsub.f32 %v918, 1.0
        %v922 = vsub.f32 %v920, 1.0
        %v923 = vsel %vm913, %v905, %v921
        %v924 = vsel %vm914, %v910, %v922
        %v925 = vlaneseq
        %v926 = vshrl.u32 %v925, 7
        %v927 = vsub.s32 1, %v926
        %v928 = vrot.slane %v384, %v927
        %v929 = vmul.f32 %v923, %v928
        %v930 = vmul.f32 %v924, %v928
        %v931 = vadd.f32 %v780, %v929
        %v932 = vadd.f32 %v781, %v930
        %933 = vset.pattern.permute.xlu0 2
        %934 = vperm.xlu0 %933, %v546
        %v935 = vpop.permute.xlu0 %934
        %937 = vset.pattern.permute.xlu0 2
        %938 = vperm.xlu0 %937, %v551
        %v939 = vpop.permute.xlu0 %938
        %v941 = vlaneseq
        %v942 = vshrl.u32 %v941, 7
        %v943 = vsub.s32 2, %v942
        %v944 = vrot.slane %v624, %v943
        %v945 = vadd.f32 %v935, %v944
        %v946 = vadd.f32 %v939, %v944
        %vm947 = vcmp.gt.f32.partialorder %v945, 0.0
        %vm948 = vcmp.gt.f32.partialorder %v946, 0.0
        %v949 = vmul.f32 %v945, 0.2
        %v950 = vmul.f32 %v946, 0.2
        %v951 = vsel %vm947, %v945, %v949
        %v952 = vsel %vm948, %v946, %v950
        %v953 = vsel %vm627, %v951, -9e+15
        %v954 = vsel %vm628, %v952, -9e+15
        %v955 = vsel %vm390, %v953, -inf
        %956 = vmax.xlane.f32.xlu0 %v955
        %v957 = vpop.xlane.xlu0 %956
        %v958 = vsel %vm390, %v954, -inf
        %959 = vmax.xlane.f32.xlu0 %v958
        %v960 = vpop.xlane.xlu0 %959
        %v961 = vsub.f32 %v953, %v957
        %v962 = vsub.f32 %v954, %v960
        %v963 = vmul.f32 %v961, 1.442695
        %v964 = vpow.pop %v963
        %v965 = vmul.f32 %v962, 1.442695
        %v966 = vpow.pop %v965
        %v967 = vsel %vm390, %v964, 0.0
        %968 = vadd.xlane.f32.xlu0 %v967
        %v969 = vpop.xlane.xlu0 %968
        %v970 = vsel %vm390, %v966, 0.0
        %971 = vadd.xlane.f32.xlu0 %v970
        %v972 = vpop.xlane.xlu0 %971
        %v973 = vrcp.pop %v969
        %v974 = vrcp.pop %v972
        %v975 = vmul.f32 %v969, %v973
        %v976 = vmul.f32 %v972, %v974
        %v977 = vsub.f32 2.0, %v975
        %v978 = vsub.f32 2.0, %v976
        %v979 = vmul.f32 %v973, %v977
        %v980 = vmul.f32 %v974, %v978
        %v981 = vmul.f32 %v964, %v979
        %v982 = vmul.f32 %v966, %v980
        %v984 = vsel %vm390, %v981, 0
        %v987 = vsel %vm390, %v982, 0
        %989 = vmatprep.subr.mxu0 0.0
        %990 = vmatpush1.msra.mxu0 %v464
        %991 = vmatprep.subr.mxu0 0.0
        %992 = vmatpush1.msra.mxu0 %v469
        %993 = vmatprep.subr.mxu0 0.0
        %994 = vmatpush1.msra.mxu0 0.0
        %995 = vmatprep.subr.mxu0 0.0
        %996 = vmatpush1.msra.mxu0 0.0
        %997 = vmatprep.subr.mxu0 0.0
        %998 = vmatpush1.msra.mxu0 0.0
        %999 = vmatprep.subr.mxu0 0.0
        %1000 = vmatpush1.msra.mxu0 0.0
        %1001 = vmatprep.subr.mxu0 0.0
        %1002 = vmatpush1.msra.mxu0 0.0
        %1003 = vmatprep.subr.mxu0 0.0
        %1004 = vmatpush1.msra.mxu0 0.0
        %1005 = vmatprep.subr.mxu0 0.0
        %1006 = vmatpush1.msra.mxu0 0.0
        %1007 = vmatprep.subr.mxu0 0.0
        %1008 = vmatpush1.msra.mxu0 0.0
        %1009 = vmatprep.subr.mxu0 0.0
        %1010 = vmatpush1.msra.mxu0 0.0
        %1011 = vmatprep.subr.mxu0 0.0
        %1012 = vmatpush1.msra.mxu0 0.0
        %1013 = vmatprep.subr.mxu0 0.0
        %1014 = vmatpush1.msra.mxu0 0.0
        %1015 = vmatprep.subr.mxu0 0.0
        %1016 = vmatpush1.msra.mxu0 0.0
        %1017 = vmatprep.subr.mxu0 0.0
        %1018 = vmatpush1.msra.mxu0 0.0
        %1019 = vmatprep.subr.mxu0 0.0
        %1020 = vmatpush1.msra.mxu0 0.0
        %1021 = vmatprep.subr.mxu0 0.0
        %1022 = vmatpush1.msra.mxu0 0.0
        %1023 = vmatprep.subr.mxu0 0.0
        %1024 = vmatpush1.msra.mxu0 0.0
        %1025 = vmatprep.subr.mxu0 0.0
        %1026 = vmatpush1.msra.mxu0 0.0
        %1027 = vmatprep.subr.mxu0 0.0
        %1028 = vmatpush1.msra.mxu0 0.0
        %1029 = vmatprep.subr.mxu0 0.0
        %1030 = vmatpush1.msra.mxu0 0.0
        %1031 = vmatprep.subr.mxu0 0.0
        %1032 = vmatpush1.msra.mxu0 0.0
        %1033 = vmatprep.subr.mxu0 0.0
        %1034 = vmatpush1.msra.mxu0 0.0
        %1035 = vmatprep.subr.mxu0 0.0
        %1036 = vmatpush1.msra.mxu0 0.0
        %1037 = vmatprep.subr.mxu0 0.0
        %1038 = vmatpush1.msra.mxu0 0.0
        %1039 = vmatprep.subr.mxu0 0.0
        %1040 = vmatpush1.msra.mxu0 0.0
        %1041 = vmatprep.subr.mxu0 0.0
        %1042 = vmatpush1.msra.mxu0 0.0
        %1043 = vmatprep.subr.mxu0 0.0
        %1044 = vmatpush1.msra.mxu0 0.0
        %1045 = vmatprep.subr.mxu0 0.0
        %1046 = vmatpush1.msra.mxu0 0.0
        %1047 = vmatprep.subr.mxu0 0.0
        %1048 = vmatpush1.msra.mxu0 0.0
        %1049 = vmatprep.subr.mxu0 0.0
        %1050 = vmatpush1.msra.mxu0 0.0
        %1051 = vmatprep.subr.mxu0 0.0
        %1052 = vmatpush1.msra.mxu0 0.0
        %1053 = vmatprep.mubr.f32.mxu0 0.0
        %1054 = vmatmul.mubr.f32.gmra.mrb[0].mxu0 %v984
        %v1055 = vpop.f32.mrb[0].mxu0
        %v1056 = vadd.f32 0.0, %v1055
        %v1057 = vpop.f32.mrb[0].mxu0
        %1058 = vmatprep.mubr.f32.mxu0 0.0
        %1059 = vmatmul.mubr.f32.gmra.mrb[0].mxu0 %v987
        %v1060 = vpop.f32.mrb[0].mxu0
        %v1061 = vadd.f32 0.0, %v1060
        %v1062 = vpop.f32.mrb[0].mxu0
        %1063 = vdwg.mxu0
        %vm1064 = vcmp.gt.f32.partialorder %v1056, 0.0
        %vm1065 = vcmp.gt.f32.partialorder %v1061, 0.0
        %v1066 = vmin.f32 %v1056, 0.0
        %v1067 = vmin.f32 %v1061, 0.0
        %v1068 = vmul.f32 %v1066, 1.442695
        %v1069 = vpow.pop %v1068
        %v1070 = vmul.f32 %v1067, 1.442695
        %v1071 = vpow.pop %v1070
        %v1072 = vsub.f32 %v1069, 1.0
        %v1073 = vsub.f32 %v1071, 1.0
        %v1074 = vsel %vm1064, %v1056, %v1072
        %v1075 = vsel %vm1065, %v1061, %v1073
        %v1076 = vlaneseq
        %v1077 = vshrl.u32 %v1076, 7
        %v1078 = vsub.s32 2, %v1077
        %v1079 = vrot.slane %v384, %v1078
        %v1080 = vmul.f32 %v1074, %v1079
        %v1081 = vmul.f32 %v1075, %v1079
        %v1082 = vadd.f32 %v931, %v1080
        %v1083 = vadd.f32 %v932, %v1081
        %1084 = vset.pattern.permute.xlu0 3
        %1085 = vperm.xlu0 %1084, %v546
        %v1086 = vpop.permute.xlu0 %1085
        %1088 = vset.pattern.permute.xlu0 3
        %1089 = vperm.xlu0 %1088, %v551
        %v1090 = vpop.permute.xlu0 %1089
        %v1092 = vlaneseq
        %v1093 = vshrl.u32 %v1092, 7
        %v1094 = vsub.s32 3, %v1093
        %v1095 = vrot.slane %v624, %v1094
        %v1096 = vadd.f32 %v1086, %v1095
        %v1097 = vadd.f32 %v1090, %v1095
        %vm1098 = vcmp.gt.f32.partialorder %v1096, 0.0
        %vm1099 = vcmp.gt.f32.partialorder %v1097, 0.0
        %v1100 = vmul.f32 %v1096, 0.2
        %v1101 = vmul.f32 %v1097, 0.2
        %v1102 = vsel %vm1098, %v1096, %v1100
        %v1103 = vsel %vm1099, %v1097, %v1101
        %v1104 = vsel %vm627, %v1102, -9e+15
        %v1105 = vsel %vm628, %v1103, -9e+15
        %v1106 = vsel %vm390, %v1104, -inf
        %1107 = vmax.xlane.f32.xlu0 %v1106
        %v1108 = vpop.xlane.xlu0 %1107
        %v1109 = vsel %vm390, %v1105, -inf
        %1110 = vmax.xlane.f32.xlu0 %v1109
        %v1111 = vpop.xlane.xlu0 %1110
        %v1112 = vsub.f32 %v1104, %v1108
        %v1113 = vsub.f32 %v1105, %v1111
        %v1114 = vmul.f32 %v1112, 1.442695
        %v1115 = vpow.pop %v1114
        %v1116 = vmul.f32 %v1113, 1.442695
        %v1117 = vpow.pop %v1116
        %v1118 = vsel %vm390, %v1115, 0.0
        %1119 = vadd.xlane.f32.xlu0 %v1118
        %v1120 = vpop.xlane.xlu0 %1119
        %v1121 = vsel %vm390, %v1117, 0.0
        %1122 = vadd.xlane.f32.xlu0 %v1121
        %v1123 = vpop.xlane.xlu0 %1122
        %v1124 = vrcp.pop %v1120
        %v1125 = vrcp.pop %v1123
        %v1126 = vmul.f32 %v1120, %v1124
        %v1127 = vmul.f32 %v1123, %v1125
        %v1128 = vsub.f32 2.0, %v1126
        %v1129 = vsub.f32 2.0, %v1127
        %v1130 = vmul.f32 %v1124, %v1128
        %v1131 = vmul.f32 %v1125, %v1129
        %v1132 = vmul.f32 %v1115, %v1130
        %v1133 = vmul.f32 %v1117, %v1131
        %v1135 = vsel %vm390, %v1132, 0
        %v1138 = vsel %vm390, %v1133, 0
        %1140 = vmatprep.subr.mxu0 0.0
        %1141 = vmatpush1.msra.mxu0 %v464
        %1142 = vmatprep.subr.mxu0 0.0
        %1143 = vmatpush1.msra.mxu0 %v469
        %1144 = vmatprep.subr.mxu0 0.0
        %1145 = vmatpush1.msra.mxu0 0.0
        %1146 = vmatprep.subr.mxu0 0.0
        %1147 = vmatpush1.msra.mxu0 0.0
        %1148 = vmatprep.subr.mxu0 0.0
        %1149 = vmatpush1.msra.mxu0 0.0
        %1150 = vmatprep.subr.mxu0 0.0
        %1151 = vmatpush1.msra.mxu0 0.0
        %1152 = vmatprep.subr.mxu0 0.0
        %1153 = vmatpush1.msra.mxu0 0.0
        %1154 = vmatprep.subr.mxu0 0.0
        %1155 = vmatpush1.msra.mxu0 0.0
        %1156 = vmatprep.subr.mxu0 0.0
        %1157 = vmatpush1.msra.mxu0 0.0
        %1158 = vmatprep.subr.mxu0 0.0
        %1159 = vmatpush1.msra.mxu0 0.0
        %1160 = vmatprep.subr.mxu0 0.0
        %1161 = vmatpush1.msra.mxu0 0.0
        %1162 = vmatprep.subr.mxu0 0.0
        %1163 = vmatpush1.msra.mxu0 0.0
        %1164 = vmatprep.subr.mxu0 0.0
        %1165 = vmatpush1.msra.mxu0 0.0
        %1166 = vmatprep.subr.mxu0 0.0
        %1167 = vmatpush1.msra.mxu0 0.0
        %1168 = vmatprep.subr.mxu0 0.0
        %1169 = vmatpush1.msra.mxu0 0.0
        %1170 = vmatprep.subr.mxu0 0.0
        %1171 = vmatpush1.msra.mxu0 0.0
        %1172 = vmatprep.subr.mxu0 0.0
        %1173 = vmatpush1.msra.mxu0 0.0
        %1174 = vmatprep.subr.mxu0 0.0
        %1175 = vmatpush1.msra.mxu0 0.0
        %1176 = vmatprep.subr.mxu0 0.0
        %1177 = vmatpush1.msra.mxu0 0.0
        %1178 = vmatprep.subr.mxu0 0.0
        %1179 = vmatpush1.msra.mxu0 0.0
        %1180 = vmatprep.subr.mxu0 0.0
        %1181 = vmatpush1.msra.mxu0 0.0
        %1182 = vmatprep.subr.mxu0 0.0
        %1183 = vmatpush1.msra.mxu0 0.0
        %1184 = vmatprep.subr.mxu0 0.0
        %1185 = vmatpush1.msra.mxu0 0.0
        %1186 = vmatprep.subr.mxu0 0.0
        %1187 = vmatpush1.msra.mxu0 0.0
        %1188 = vmatprep.subr.mxu0 0.0
        %1189 = vmatpush1.msra.mxu0 0.0
        %1190 = vmatprep.subr.mxu0 0.0
        %1191 = vmatpush1.msra.mxu0 0.0
        %1192 = vmatprep.subr.mxu0 0.0
        %1193 = vmatpush1.msra.mxu0 0.0
        %1194 = vmatprep.subr.mxu0 0.0
        %1195 = vmatpush1.msra.mxu0 0.0
        %1196 = vmatprep.subr.mxu0 0.0
        %1197 = vmatpush1.msra.mxu0 0.0
        %1198 = vmatprep.subr.mxu0 0.0
        %1199 = vmatpush1.msra.mxu0 0.0
        %1200 = vmatprep.subr.mxu0 0.0
        %1201 = vmatpush1.msra.mxu0 0.0
        %1202 = vmatprep.subr.mxu0 0.0
        %1203 = vmatpush1.msra.mxu0 0.0
        %1204 = vmatprep.mubr.f32.mxu0 0.0
        %1205 = vmatmul.mubr.f32.gmra.mrb[0].mxu0 %v1135
        %v1206 = vpop.f32.mrb[0].mxu0
        %v1207 = vadd.f32 0.0, %v1206
        %v1208 = vpop.f32.mrb[0].mxu0
        %1209 = vmatprep.mubr.f32.mxu0 0.0
        %1210 = vmatmul.mubr.f32.gmra.mrb[0].mxu0 %v1138
        %v1211 = vpop.f32.mrb[0].mxu0
        %v1212 = vadd.f32 0.0, %v1211
        %v1213 = vpop.f32.mrb[0].mxu0
        %1214 = vdwg.mxu0
        %vm1215 = vcmp.gt.f32.partialorder %v1207, 0.0
        %vm1216 = vcmp.gt.f32.partialorder %v1212, 0.0
        %v1217 = vmin.f32 %v1207, 0.0
        %v1218 = vmin.f32 %v1212, 0.0
        %v1219 = vmul.f32 %v1217, 1.442695
        %v1220 = vpow.pop %v1219
        %v1221 = vmul.f32 %v1218, 1.442695
        %v1222 = vpow.pop %v1221
        %v1223 = vsub.f32 %v1220, 1.0
        %v1224 = vsub.f32 %v1222, 1.0
        %v1225 = vsel %vm1215, %v1207, %v1223
        %v1226 = vsel %vm1216, %v1212, %v1224
        %v1227 = vlaneseq
        %v1228 = vshrl.u32 %v1227, 7
        %v1229 = vsub.s32 3, %v1228
        %v1230 = vrot.slane %v384, %v1229
        %v1231 = vmul.f32 %v1225, %v1230
        %v1232 = vmul.f32 %v1226, %v1230
        %v1233 = vadd.f32 %v1082, %v1231
        %v1234 = vadd.f32 %v1083, %v1232
        %v1236 = vlaneseq
        %v1237 = vshrl.u32 %v1236, 7
        %v1238 = vsub.s32 0, %v1237
        %v1239 = vrot.slane %v389, %v1238
        %v1242 = vsel %vm472, %v1233, 0
        %v1245 = vsel %vm472, %v1234, 0
        %1247 = vmatprep.subr.mxu0 0.0
        %1248 = vmatpush1.msra.mxu0 %v385
        %1249 = vmatprep.subr.mxu0 0.0
        %1250 = vmatpush1.msra.mxu0 %v386
        %1251 = vmatprep.subr.mxu0 0.0
        %1252 = vmatpush1.msra.mxu0 %v387
        %1253 = vmatprep.subr.mxu0 0.0
        %1254 = vmatpush1.msra.mxu0 %v388
        %1255 = vmatprep.subr.mxu0 0.0
        %1256 = vmatpush1.msra.mxu0 0.0
        %1257 = vmatprep.subr.mxu0 0.0
        %1258 = vmatpush1.msra.mxu0 0.0
        %1259 = vmatprep.subr.mxu0 0.0
        %1260 = vmatpush1.msra.mxu0 0.0
        %1261 = vmatprep.subr.mxu0 0.0
        %1262 = vmatpush1.msra.mxu0 0.0
        %1263 = vmatprep.subr.mxu0 0.0
        %1264 = vmatpush1.msra.mxu0 0.0
        %1265 = vmatprep.subr.mxu0 0.0
        %1266 = vmatpush1.msra.mxu0 0.0
        %1267 = vmatprep.subr.mxu0 0.0
        %1268 = vmatpush1.msra.mxu0 0.0
        %1269 = vmatprep.subr.mxu0 0.0
        %1270 = vmatpush1.msra.mxu0 0.0
        %1271 = vmatprep.subr.mxu0 0.0
        %1272 = vmatpush1.msra.mxu0 0.0
        %1273 = vmatprep.subr.mxu0 0.0
        %1274 = vmatpush1.msra.mxu0 0.0
        %1275 = vmatprep.subr.mxu0 0.0
        %1276 = vmatpush1.msra.mxu0 0.0
        %1277 = vmatprep.subr.mxu0 0.0
        %1278 = vmatpush1.msra.mxu0 0.0
        %1279 = vmatprep.subr.mxu0 0.0
        %1280 = vmatpush1.msra.mxu0 0.0
        %1281 = vmatprep.subr.mxu0 0.0
        %1282 = vmatpush1.msra.mxu0 0.0
        %1283 = vmatprep.subr.mxu0 0.0
        %1284 = vmatpush1.msra.mxu0 0.0
        %1285 = vmatprep.subr.mxu0 0.0
        %1286 = vmatpush1.msra.mxu0 0.0
        %1287 = vmatprep.subr.mxu0 0.0
        %1288 = vmatpush1.msra.mxu0 0.0
        %1289 = vmatprep.subr.mxu0 0.0
        %1290 = vmatpush1.msra.mxu0 0.0
        %1291 = vmatprep.subr.mxu0 0.0
        %1292 = vmatpush1.msra.mxu0 0.0
        %1293 = vmatprep.subr.mxu0 0.0
        %1294 = vmatpush1.msra.mxu0 0.0
        %1295 = vmatprep.subr.mxu0 0.0
        %1296 = vmatpush1.msra.mxu0 0.0
        %1297 = vmatprep.subr.mxu0 0.0
        %1298 = vmatpush1.msra.mxu0 0.0
        %1299 = vmatprep.subr.mxu0 0.0
        %1300 = vmatpush1.msra.mxu0 0.0
        %1301 = vmatprep.subr.mxu0 0.0
        %1302 = vmatpush1.msra.mxu0 0.0
        %1303 = vmatprep.subr.mxu0 0.0
        %1304 = vmatpush1.msra.mxu0 0.0
        %1305 = vmatprep.subr.mxu0 0.0
        %1306 = vmatpush1.msra.mxu0 0.0
        %1307 = vmatprep.subr.mxu0 0.0
        %1308 = vmatpush1.msra.mxu0 0.0
        %1309 = vmatprep.subr.mxu0 0.0
        %1310 = vmatpush1.msra.mxu0 0.0
        %1311 = vmatprep.mubr.f32.mxu0 0.0
        %1312 = vmatmul.mubr.f32.gmra.mrb[0].mxu0 %v1242
        %v1313 = vpop.f32.mrb[0].mxu0
        %v1314 = vadd.f32 %v1239, %v1313
        %v1315 = vpop.f32.mrb[0].mxu0
        %1316 = vmatprep.mubr.f32.mxu0 0.0
        %1317 = vmatmul.mubr.f32.gmra.mrb[0].mxu0 %v1245
        %v1318 = vpop.f32.mrb[0].mxu0
        %v1319 = vadd.f32 %v1239, %v1318
        %v1320 = vpop.f32.mrb[0].mxu0
        %1321 = vdwg.mxu0
        %1322 = vst.msk [vmem:[%s367] sm:$0xff] %vm472, %v1314
        %1323 = vst.msk [vmem:[%s367 + $0x8] sm:$0xff] %vm472, %v1319
        %s1324 = sand.u32 %s212, 1
        %s1325 = scalar_lea.sflag [#allocation4], %s1324
        %s1326 = sand.u32 %s212, 1
        %s1327 = smul.addr %s1326, 16
        %s1328 = scalar_lea.vmem [#allocation8], %s1327
        // Predicated region
        $region65: #{tpu_custom_call.1} parent=51 // pred_check
          %p1329 = pneg %p222
        $region66: #{tpu_custom_call.1} parent=51 // pred_check_branch
          %1331 = sbr.rel (%p1329) target = $region68
        $region67: #{tpu_custom_call.1} parent=51 // pred_region
          %s1333 = ssub.s32 256, 256
          %1334 = vsyncadd %s1325, %s1333
          %s1335 = smul.addr %s26, 2
          %s1336 = smul.addr %s1335, 128
          %s1337 = scalar_lea.hbm %s8, %s1336
          %s1338 = sshll.u32 %s1328, 4
          %s1339 = int_to_ptr.vmem [resolvable:$true] %s1338
          %1344 = dma.vmem_to_hbm [thread:$0]  %s1339, 256, %s1337, %s1325, 128, 128, 8
        $region68: #{tpu_custom_call.1} parent=51 // pred_fallthru
          _
      $region52: #{tpu_custom_call.1} parent=5 // pred_fallthru
        _
      %p1345 = scmp.le.s32.totalorder 2, %s21
      // Predicated region
      $region69: #{tpu_custom_call.1} parent=5 // pred_check
        %p1346 = pneg %p1345
      $region70: #{tpu_custom_call.1} parent=5 // pred_check_branch
        %1348 = sbr.rel (%p1346) target = $region72
      $region71: #{tpu_custom_call.1} parent=5 // pred_region
        %s1349 = ssub.s32 %s21, 2
        // Predicated region
        $region73: #{tpu_custom_call.1} parent=71 // pred_check
          %p1350 = pneg %p228
        $region74: #{tpu_custom_call.1} parent=71 // pred_check_branch
          %1352 = sbr.rel (%p1350) target = $region76
        $region75: #{tpu_custom_call.1} parent=71 // pred_region
          %s1353 = sand.u32 %s213, 1
          %s1354 = scalar_lea.sflag [#allocation4], %s1353
          %s1355 = sand.u32 %s213, 1
          %s1356 = smul.addr %s1355, 16
          %s1357 = scalar_lea.vmem [#allocation8], %s1356
          %1358 = dma.done %s1354, 256
        $region76: #{tpu_custom_call.1} parent=71 // pred_fallthru
          _
      $region72: #{tpu_custom_call.1} parent=5 // pred_fallthru
        _
    $region6: #{tpu_custom_call.1} parent=1 // loop_footer
      %s25 = sadd.s32 1, %s21
    $region7: #{tpu_custom_call.1} parent=1 // loop_footer_branch
      %20 = sbr.rel target = $region3
    $region8: #{tpu_custom_call.1} parent=1 // loop_exit
      _
    %1359 = vsyncpa [#allocation3], 1
    %s1360 = scalar_lea.sflag [#allocation3], 1
    %1361 = vsyncpa %s1360, 1
    %1362 = vsyncpa [#allocation6], 1
    %1363 = vsyncpa [#allocation4], 1
    %s1364 = scalar_lea.sflag [#allocation4], 1
    %1365 = vsyncpa %s1364, 1

</llo_original>
